<compile_context>
chip_gen: v6e
topology: v6e:2x2x1
jax: 0.10.0
libtpu: 0.0.40
codegen_flags: <defaults>
</compile_context>

<pallas_src>
import functools
import math

import jax
import jax.numpy as jnp
from jax import lax
from jax.experimental import pallas as pl
from jax.experimental.pallas import tpu as pltpu

EPS = 1e-5  # nn.LayerNorm default


# ------------------------------ helpers --------------------------------------


def _round_up(v, m):
    return ((v + m - 1) // m) * m


def _pad_axis(a, axis, target):
    if a.shape[axis] == target:
        return a
    widths = [(0, 0)] * a.ndim
    widths[axis] = (0, target - a.shape[axis])
    return jnp.pad(a, widths)


def _layernorm_padded(x, g, b, d_real):
    # x is exactly zero in lane-padded columns, so plain full-row sums divided
    # by the REAL width give the correct mean / E[x^2]; no mask needed.
    inv_d = 1.0 / d_real
    mean = jnp.sum(x, axis=-1, keepdims=True) * inv_d
    msq = jnp.sum(x * x, axis=-1, keepdims=True) * inv_d
    var = msq - mean * mean
    return (x - mean) * lax.rsqrt(var + EPS) * g + b


def _gelu_exact(x):
    # nn.GELU() default = exact (erf) variant
    return 0.5 * x * (1.0 + lax.erf(x / jnp.sqrt(2.0).astype(x.dtype)))


# ------------------------------ fused kernel ---------------------------------


def transformer_kernel(x_ref,                       # (Bt, N, Dp)  activations
                       g1_ref, b1_ref,              # (1, 1, Dp)   attn LayerNorm
                       wqkv_ref,                    # (1, Dp, 3*inner) bf16, Q pre-scaled
                       wo_ref, bo_ref,              # (1, inner, Dp) bf16, (1, 1, Dp)
                       g2_ref, b2_ref,              # (1, 1, Dp)   ff LayerNorm
                       w1_ref, c1_ref,              # (1, Dp, Fp) bf16, (1, 1, Fp)
                       w2_ref, c2_ref,              # (1, Fp, Dp) bf16, (1, 1, Dp)
                       gf_ref, bf_ref,              # (1, Dp)      final LayerNorm
                       o_ref,                       # (Bt, N, Dp)  output
                       x_scr,                       # VMEM (Bt*N, Dp) f32 resident acts
                       ao_scr,                      # VMEM (Bt*N, inner) f32 head outputs
                       *, heads, dim_head, batch_tile, seq, d_real, f_tile):
    layer = pl.program_id(1)
    inner = heads * dim_head
    dp = x_scr.shape[1]
    fp = w1_ref.shape[2]

    # Load the batch tile into the resident VMEM accumulator at layer 0.
    @pl.when(layer == 0)
    def _():
        for b in range(batch_tile):
            x_scr[b * seq:(b + 1) * seq, :] = x_ref[b].astype(jnp.float32)

    x = x_scr[...]                                               # (rows, Dp) f32

    # ---------------- Attention block (pre-norm) ----------------
    xn = _layernorm_padded(x, g1_ref[0], b1_ref[0], d_real)
    qkv = jnp.dot(xn.astype(jnp.bfloat16), wqkv_ref[0],
                  preferred_element_type=jnp.float32)            # (rows, 3*inner)

    for b in range(batch_tile):
        r0 = b * seq
        for h in range(heads):
            c0 = h * dim_head
            q = qkv[r0:r0 + seq, c0:c0 + dim_head]
            k = qkv[r0:r0 + seq, inner + c0:inner + c0 + dim_head]
            v = qkv[r0:r0 + seq, 2 * inner + c0:2 * inner + c0 + dim_head]
            s = lax.dot_general(q.astype(jnp.bfloat16), k.astype(jnp.bfloat16),
                                (((1,), (1,)), ((), ())),
                                preferred_element_type=jnp.float32)   # (seq, seq)
            s = s - jnp.max(s, axis=-1, keepdims=True)
            e = jnp.exp(s)
            denom = jnp.sum(e, axis=-1, keepdims=True)
            o = jnp.dot(e.astype(jnp.bfloat16), v.astype(jnp.bfloat16),
                        preferred_element_type=jnp.float32)           # (seq, dh)
            # fold softmax normalization into the small (seq, dh) head output
            ao_scr[r0:r0 + seq, c0:c0 + dim_head] = (
                o * pl.reciprocal(denom, approx=True))

    # single wide out-projection on the concatenated head outputs
    attn_out = jnp.dot(ao_scr[...].astype(jnp.bfloat16), wo_ref[0],
                       preferred_element_type=jnp.float32)            # (rows, Dp)
    x = x + attn_out + bo_ref[0]

    # ---------------- FeedForward block (pre-norm), F-tiled ----------------
    xn = _layernorm_padded(x, g2_ref[0], b2_ref[0], d_real)
    xn_b = xn.astype(jnp.bfloat16)
    y = jnp.zeros_like(x)
    for c in range(fp // f_tile):
        f0 = c * f_tile
        h = jnp.dot(xn_b, w1_ref[0, :, f0:f0 + f_tile],
                    preferred_element_type=jnp.float32) + c1_ref[0, :, f0:f0 + f_tile]
        h = _gelu_exact(h)
        y = y + jnp.dot(h.astype(jnp.bfloat16), w2_ref[0, f0:f0 + f_tile, :],
                        preferred_element_type=jnp.float32)
    x = x + y + c2_ref[0]

    x_scr[...] = x                                               # carry to next layer

    # Final LayerNorm + single lane-dense HBM writeback at the last layer.
    @pl.when(layer == pl.num_programs(1) - 1)
    def _():
        out = _layernorm_padded(x, gf_ref[...], bf_ref[...], d_real).astype(o_ref.dtype)
        for b in range(batch_tile):
            o_ref[b] = out[b * seq:(b + 1) * seq, :]


# ---------------------- param packing + pallas wrapper -----------------------


def pack_params(params, *, heads, dim_head):
    """PyTorch-layout params -> stacked, lane-padded, bf16, scale-folded layout.

    Call ONCE and reuse (hoisted out of the forward per review).
    """
    inner = heads * dim_head
    scale = dim_head ** (-0.5)
    d = params["layers"][0]["attn"]["wqkv"].shape[0]
    f = params["layers"][0]["ff"]["w1"].shape[1]
    dp = _round_up(d, 128)
    fp = _round_up(f, 128)

    def pad_row(v, tgt):                      # (1, d) -> (1, tgt), zero padded, f32
        return _pad_axis(v.astype(jnp.float32), 1, tgt)

    cols = {k: [] for k in
            ("g1", "b1", "wqkv", "wo", "bo", "g2", "b2", "w1", "c1", "w2", "c2")}
    for L in params["layers"]:
        a, ff = L["attn"], L["ff"]
        wqkv_s = a["wqkv"].at[:, :inner].multiply(scale)          # fold softmax scale into Q
        cols["wqkv"].append(_pad_axis(wqkv_s, 0, dp).astype(jnp.bfloat16))
        cols["wo"].append(_pad_axis(a["wout"], 1, dp).astype(jnp.bfloat16))
        cols["bo"].append(pad_row(a["bout"], dp))
        cols["g1"].append(pad_row(a["g"], dp))                    # padded gamma/beta = 0
        cols["b1"].append(pad_row(a["b"], dp))
        cols["g2"].append(pad_row(ff["g"], dp))
        cols["b2"].append(pad_row(ff["b"], dp))
        cols["w1"].append(_pad_axis(_pad_axis(ff["w1"], 0, dp), 1, fp).astype(jnp.bfloat16))
        cols["c1"].append(pad_row(ff["b1"], fp))
        cols["w2"].append(_pad_axis(_pad_axis(ff["w2"], 0, fp), 1, dp).astype(jnp.bfloat16))
        cols["c2"].append(pad_row(ff["b2"], dp))

    packed = {k: jnp.stack(v) for k, v in cols.items()}
    packed["gf"] = pad_row(params["g"], dp)
    packed["bf"] = pad_row(params["b"], dp)
    return packed


def transformer_forward(x, packed, *, heads, dim_head, batch_tile=None, f_tile=None):
    B, N, D = x.shape
    depth, Dp = packed["wqkv"].shape[0], packed["wqkv"].shape[1]
    Fp = packed["w1"].shape[2]
    inner = heads * dim_head

    Bt = batch_tile or B
    assert B % Bt == 0, "batch must be divisible by batch_tile"
    Ft = f_tile or (512 if Fp % 512 == 0 else Fp)
    assert Fp % Ft == 0

    xp = _pad_axis(x, 2, Dp)                  # zero lane-padding of the residual stream

    layer_names = ["g1", "b1", "wqkv", "wo", "bo", "g2", "b2", "w1", "c1", "w2", "c2"]
    layer_weights = [packed[n] for n in layer_names]
    final_weights = [packed["gf"], packed["bf"]]

    act_spec = pl.BlockSpec((Bt, N, Dp), lambda b, l: (b, 0, 0))

    def layer_spec(arr):                      # layer l's slab of the depth stack
        nd = arr.ndim
        return pl.BlockSpec((1,) + arr.shape[1:],
                            lambda b, l, _nd=nd: (l,) + (0,) * (_nd - 1))

    def const_spec(arr):                      # whole array, constant across grid
        nd = arr.ndim
        return pl.BlockSpec(arr.shape, lambda b, l, _nd=nd: (0,) * _nd)

    in_specs = ([act_spec]
                + [layer_spec(w) for w in layer_weights]
                + [const_spec(w) for w in final_weights])

    rows = Bt * N

    # Explicit VMEM budget: double-buffered per-layer weights + resident
    # activation/output blocks + scratches + slack (re-derived for v7x 64 MiB).
    layer_bytes = sum(math.prod(w.shape[1:]) * w.dtype.itemsize for w in layer_weights)
    act_bytes = Bt * N * Dp * x.dtype.itemsize
    scratch_bytes = rows * Dp * 4 + rows * inner * 4
    vmem_limit = 2 * layer_bytes + 4 * act_bytes + scratch_bytes + (8 << 20)
    vmem_limit = int(min(max(vmem_limit, 32 << 20), 100 << 20))

    kernel = functools.partial(
        transformer_kernel, heads=heads, dim_head=dim_head,
        batch_tile=Bt, seq=N, d_real=D, f_tile=Ft)

    out = pl.pallas_call(
        kernel,
        out_shape=jax.ShapeDtypeStruct((B, N, Dp), x.dtype),
        grid=(B // Bt, depth),
        in_specs=in_specs,
        out_specs=act_spec,
        scratch_shapes=[pltpu.VMEM((rows, Dp), jnp.float32),
                        pltpu.VMEM((rows, inner), jnp.float32)],
        compiler_params=pltpu.CompilerParams(
            dimension_semantics=("parallel", "arbitrary"),
            vmem_limit_bytes=vmem_limit),
    )(xp, *layer_weights, *final_weights)

    return out[..., :D]


# --------------------------- params + reference -------------------------------


def init_params(key, dim, depth, heads, dim_head, mlp_dim):
    inner = heads * dim_head
    layers = []
    for _ in range(depth):
        key, k1, k2, k3 = jax.random.split(key, 4)
        attn = dict(
            g=jnp.ones((1, dim), jnp.float32),
            b=jnp.zeros((1, dim), jnp.float32),
            wqkv=0.05 * jax.random.normal(k1, (dim, 3 * inner), jnp.float32),
            wout=0.05 * jax.random.normal(k2, (inner, dim), jnp.float32),
            bout=0.01 * jax.random.normal(k3, (1, dim), jnp.float32),
        )
        key, k5, k6, k7, k8 = jax.random.split(key, 5)
        ff = dict(
            g=jnp.ones((1, dim), jnp.float32),
            b=jnp.zeros((1, dim), jnp.float32),
            w1=0.05 * jax.random.normal(k5, (dim, mlp_dim), jnp.float32),
            b1=0.01 * jax.random.normal(k6, (1, mlp_dim), jnp.float32),
            w2=0.05 * jax.random.normal(k7, (mlp_dim, dim), jnp.float32),
            b2=0.01 * jax.random.normal(k8, (1, dim), jnp.float32),
        )
        layers.append(dict(attn=attn, ff=ff))
    return dict(layers=layers,
                g=jnp.ones((1, dim), jnp.float32),
                b=jnp.zeros((1, dim), jnp.float32))


def _ln_ref(x, g, b):
    mean = jnp.mean(x, axis=-1, keepdims=True)
    var = jnp.mean((x - mean) ** 2, axis=-1, keepdims=True)
    return (x - mean) * lax.rsqrt(var + EPS) * g + b


def reference_forward(x, params, *, heads, dim_head):
    """Pure-JAX f32 reference mirroring the PyTorch module semantics."""
    scale = dim_head ** (-0.5)
    inner = heads * dim_head
    B, N, D = x.shape
    for layer in params["layers"]:
        a = layer["attn"]
        xn = _ln_ref(x, a["g"][0], a["b"][0])
        qkv = xn @ a["wqkv"]
        q, k, v = jnp.split(qkv, 3, axis=-1)
        q = q.reshape(B, N, heads, dim_head).transpose(0, 2, 1, 3)
        k = k.reshape(B, N, heads, dim_head).transpose(0, 2, 1, 3)
        v = v.reshape(B, N, heads, dim_head).transpose(0, 2, 1, 3)
        dots = jnp.einsum('bhnd,bhmd->bhnm', q, k) * scale
        attn = jax.nn.softmax(dots, axis=-1)
        out = jnp.einsum('bhnm,bhmd->bhnd', attn, v)
        out = out.transpose(0, 2, 1, 3).reshape(B, N, inner)
        x = out @ a["wout"] + a["bout"][0] + x
        f = layer["ff"]
        xn = _ln_ref(x, f["g"][0], f["b"][0])
        h = _gelu_exact(xn @ f["w1"] + f["b1"][0])
        x = h @ f["w2"] + f["b2"][0] + x
    return _ln_ref(x, params["g"][0], params["b"][0])


# --------------------------------- main ---------------------------------------


if __name__ == "__main__":
    B, N = 2, 8
    dim, depth, heads, dim_head, mlp_dim = 32, 2, 4, 8, 64

    key = jax.random.PRNGKey(0)
    kx, kp = jax.random.split(key)
    x = jax.random.normal(kx, (B, N, dim), jnp.float32)
    params = init_params(kp, dim, depth, heads, dim_head, mlp_dim)

    # Pack / pad / bf16-cast the weights once (hoisted out of the forward).
    packed = pack_params(params, heads=heads, dim_head=dim_head)

    fwd = jax.jit(functools.partial(transformer_forward, heads=heads, dim_head=dim_head))
    out = jax.block_until_ready(fwd(x, packed))

    ref = reference_forward(x, params, heads=heads, dim_head=dim_head)
    assert out.shape == (B, N, dim)
    # tolerance accounts for bf16 matmul operands + pl.reciprocal(approx=True)
    err = float(jnp.max(jnp.abs(out - ref)))
    assert jnp.allclose(out, ref, atol=5e-2, rtol=5e-2), err

    print("KERNEL_OK")
</pallas_src>

<mosaic_0001>
module attributes {stable_mosaic.version = 11 : i64} {
  func.func @transformer_kernel(%arg0: i32, %arg1: i32, %arg2: memref<2x8x128xf32, #tpu.memory_space<vmem>>, %arg3: memref<1x1x128xf32, #tpu.memory_space<vmem>>, %arg4: memref<1x1x128xf32, #tpu.memory_space<vmem>>, %arg5: memref<1x128x96xbf16, #tpu.memory_space<vmem>>, %arg6: memref<1x32x128xbf16, #tpu.memory_space<vmem>>, %arg7: memref<1x1x128xf32, #tpu.memory_space<vmem>>, %arg8: memref<1x1x128xf32, #tpu.memory_space<vmem>>, %arg9: memref<1x1x128xf32, #tpu.memory_space<vmem>>, %arg10: memref<1x128x128xbf16, #tpu.memory_space<vmem>>, %arg11: memref<1x1x128xf32, #tpu.memory_space<vmem>>, %arg12: memref<1x128x128xbf16, #tpu.memory_space<vmem>>, %arg13: memref<1x1x128xf32, #tpu.memory_space<vmem>>, %arg14: memref<1x128xf32, #tpu.memory_space<vmem>>, %arg15: memref<1x128xf32, #tpu.memory_space<vmem>>, %arg16: memref<2x8x128xf32, #tpu.memory_space<vmem>>, %arg17: memref<16x128xf32, #tpu.memory_space<vmem>>, %arg18: memref<16x32xf32, #tpu.memory_space<vmem>>) attributes {dimension_semantics = [#tpu.dimension_semantics<parallel>, #tpu.dimension_semantics<arbitrary>], iteration_bounds = array<i64: 1, 2>, scalar_prefetch = 0 : i64, scratch_operands = 2 : i64, tpu.core_type = #tpu.core_type<tc>, window_params = [{transform_indices = @transform_0, window_bounds = array<i64: 2, 8, 128>}, {transform_indices = @transform_1, window_bounds = array<i64: 1, 1, 128>}, {transform_indices = @transform_2, window_bounds = array<i64: 1, 1, 128>}, {transform_indices = @transform_3, window_bounds = array<i64: 1, 128, 96>}, {transform_indices = @transform_4, window_bounds = array<i64: 1, 32, 128>}, {transform_indices = @transform_5, window_bounds = array<i64: 1, 1, 128>}, {transform_indices = @transform_6, window_bounds = array<i64: 1, 1, 128>}, {transform_indices = @transform_7, window_bounds = array<i64: 1, 1, 128>}, {transform_indices = @transform_8, window_bounds = array<i64: 1, 128, 128>}, {transform_indices = @transform_9, window_bounds = array<i64: 1, 1, 128>}, {transform_indices = @transform_10, window_bounds = array<i64: 1, 128, 128>}, {transform_indices = @transform_11, window_bounds = array<i64: 1, 1, 128>}, {pipeline_mode = #tpu.pipeline_mode<synchronous>, transform_indices = @transform_12, window_bounds = array<i64: 1, 128>}, {pipeline_mode = #tpu.pipeline_mode<synchronous>, transform_indices = @transform_13, window_bounds = array<i64: 1, 128>}, {transform_indices = @transform_14, window_bounds = array<i64: 2, 8, 128>}]} {
    %c0_i32 = arith.constant 0 : i32
    %0 = arith.cmpi eq, %arg1, %c0_i32 : i32
    %1 = arith.extui %0 : i1 to i32
    %c0_i32_0 = arith.constant 0 : i32
    %2 = arith.cmpi ne, %1, %c0_i32_0 : i32
    scf.if %2 {
      %c0_102 = arith.constant 0 : index
      %c0_103 = arith.constant 0 : index
      %c0_104 = arith.constant 0 : index
      %262 = vector.load %arg2[%c0_102, %c0_103, %c0_104] : memref<2x8x128xf32, #tpu.memory_space<vmem>>, vector<1x8x128xf32>
      %263 = vector.shape_cast %262 : vector<1x8x128xf32> to vector<8x128xf32>
      %c0_105 = arith.constant 0 : index
      %c0_106 = arith.constant 0 : index
      %264 = vector.load %arg17[%c0_105, %c0_106] : memref<16x128xf32, #tpu.memory_space<vmem>>, vector<8x128xf32>
      tpu.vector_store %arg17[%c0_105, %c0_106], %263 {strides = array<i32>} : memref<16x128xf32, #tpu.memory_space<vmem>>, vector<8x128xf32>,
      %c1 = arith.constant 1 : index
      %c0_107 = arith.constant 0 : index
      %c0_108 = arith.constant 0 : index
      %265 = vector.load %arg2[%c1, %c0_107, %c0_108] : memref<2x8x128xf32, #tpu.memory_space<vmem>>, vector<1x8x128xf32>
      %266 = vector.shape_cast %265 : vector<1x8x128xf32> to vector<8x128xf32>
      %c8_109 = arith.constant 8 : index
      %c0_110 = arith.constant 0 : index
      %267 = vector.load %arg17[%c8_109, %c0_110] : memref<16x128xf32, #tpu.memory_space<vmem>>, vector<8x128xf32>
      tpu.vector_store %arg17[%c8_109, %c0_110], %266 {strides = array<i32>} : memref<16x128xf32, #tpu.memory_space<vmem>>, vector<8x128xf32>,
    } else {
    }
    %c0 = arith.constant 0 : index
    %c0_1 = arith.constant 0 : index
    %3 = vector.load %arg17[%c0, %c0_1] : memref<16x128xf32, #tpu.memory_space<vmem>>, vector<16x128xf32>
    %c0_2 = arith.constant 0 : index
    %c0_3 = arith.constant 0 : index
    %c0_4 = arith.constant 0 : index
    %4 = vector.load %arg3[%c0_2, %c0_3, %c0_4] : memref<1x1x128xf32, #tpu.memory_space<vmem>>, vector<1x1x128xf32>
    %5 = vector.shape_cast %4 : vector<1x1x128xf32> to vector<1x128xf32>
    %c0_5 = arith.constant 0 : index
    %c0_6 = arith.constant 0 : index
    %c0_7 = arith.constant 0 : index
    %6 = vector.load %arg4[%c0_5, %c0_6, %c0_7] : memref<1x1x128xf32, #tpu.memory_space<vmem>>, vector<1x1x128xf32>
    %7 = vector.shape_cast %6 : vector<1x1x128xf32> to vector<1x128xf32>
    %cst = arith.constant dense<0.000000e+00> : vector<16xf32>
    %8 = vector.multi_reduction <add>, %3, %cst [1] : vector<16x128xf32> to vector<16xf32>
    %9 = vector.shape_cast %8 : vector<16xf32> to vector<16x1xf32>
    %cst_8 = arith.constant 3.125000e-02 : f32
    %10 = vector.broadcast %cst_8 : f32 to vector<16x1xf32>
    %11 = arith.mulf %9, %10 : vector<16x1xf32>
    %12 = arith.mulf %3, %3 : vector<16x128xf32>
    %cst_9 = arith.constant dense<0.000000e+00> : vector<16xf32>
    %13 = vector.multi_reduction <add>, %12, %cst_9 [1] : vector<16x128xf32> to vector<16xf32>
    %14 = vector.shape_cast %13 : vector<16xf32> to vector<16x1xf32>
    %cst_10 = arith.constant 3.125000e-02 : f32
    %15 = vector.broadcast %cst_10 : f32 to vector<16x1xf32>
    %16 = arith.mulf %14, %15 : vector<16x1xf32>
    %17 = arith.mulf %11, %11 : vector<16x1xf32>
    %18 = arith.subf %16, %17 : vector<16x1xf32>
    %19 = vector.broadcast %11 : vector<16x1xf32> to vector<16x128xf32>
    %20 = arith.subf %3, %19 : vector<16x128xf32>
    %cst_11 = arith.constant 9.99999974E-6 : f32
    %21 = vector.broadcast %cst_11 : f32 to vector<16x1xf32>
    %22 = arith.addf %18, %21 : vector<16x1xf32>
    %23 = math.rsqrt %22 : vector<16x1xf32>
    %24 = vector.broadcast %23 : vector<16x1xf32> to vector<16x128xf32>
    %25 = arith.mulf %20, %24 : vector<16x128xf32>
    %26 = vector.broadcast %5 : vector<1x128xf32> to vector<16x128xf32>
    %27 = arith.mulf %25, %26 : vector<16x128xf32>
    %28 = vector.broadcast %7 : vector<1x128xf32> to vector<16x128xf32>
    %29 = arith.addf %27, %28 : vector<16x128xf32>
    %30 = arith.truncf %29 : vector<16x128xf32> to vector<16x128xbf16>
    %c0_12 = arith.constant 0 : index
    %c0_13 = arith.constant 0 : index
    %c0_14 = arith.constant 0 : index
    %31 = vector.load %arg5[%c0_12, %c0_13, %c0_14] : memref<1x128x96xbf16, #tpu.memory_space<vmem>>, vector<1x128x96xbf16>
    %32 = vector.shape_cast %31 : vector<1x128x96xbf16> to vector<128x96xbf16>
    %cst_15 = arith.constant dense<0.000000e+00> : vector<16x96xf32>
    %33 = tpu.matmul %30, %32, %cst_15 {dimension_numbers = #tpu.dot_dimension_numbers<[1], [0], [0], [1], [0, 0, 1, 1], [], []>} : vector<16x128xbf16>, vector<128x96xbf16>, vector<16x96xf32> -> vector<16x96xf32>
    %34 = vector.extract_strided_slice %33 {offsets = [0, 0], sizes = [8, 8], strides = [1, 1]} : vector<16x96xf32> to vector<8x8xf32>
    %35 = vector.extract_strided_slice %33 {offsets = [0, 32], sizes = [8, 8], strides = [1, 1]} : vector<16x96xf32> to vector<8x8xf32>
    %36 = vector.extract_strided_slice %33 {offsets = [0, 64], sizes = [8, 8], strides = [1, 1]} : vector<16x96xf32> to vector<8x8xf32>
    %37 = arith.truncf %34 : vector<8x8xf32> to vector<8x8xbf16>
    %38 = arith.truncf %35 : vector<8x8xf32> to vector<8x8xbf16>
    %cst_16 = arith.constant dense<0.000000e+00> : vector<8x8xf32>
    %39 = tpu.matmul %37, %38, %cst_16 {dimension_numbers = #tpu.dot_dimension_numbers<[1], [1], [0], [0], [0, 0, 1, 0], [], []>} : vector<8x8xbf16>, vector<8x8xbf16>, vector<8x8xf32> -> vector<8x8xf32>
    %cst_17 = arith.constant dense<0xFF800000> : vector<8xf32>
    %40 = vector.multi_reduction <maximumf>, %39, %cst_17 [1] : vector<8x8xf32> to vector<8xf32>
    %41 = vector.shape_cast %40 : vector<8xf32> to vector<8x1xf32>
    %42 = vector.broadcast %41 : vector<8x1xf32> to vector<8x8xf32>
    %43 = arith.subf %39, %42 : vector<8x8xf32>
    %44 = math.exp %43 : vector<8x8xf32>
    %cst_18 = arith.constant dense<0.000000e+00> : vector<8xf32>
    %45 = vector.multi_reduction <add>, %44, %cst_18 [1] : vector<8x8xf32> to vector<8xf32>
    %46 = vector.shape_cast %45 : vector<8xf32> to vector<8x1xf32>
    %47 = arith.truncf %44 : vector<8x8xf32> to vector<8x8xbf16>
    %48 = arith.truncf %36 : vector<8x8xf32> to vector<8x8xbf16>
    %cst_19 = arith.constant dense<0.000000e+00> : vector<8x8xf32>
    %49 = tpu.matmul %47, %48, %cst_19 {dimension_numbers = #tpu.dot_dimension_numbers<[1], [0], [0], [1], [0, 0, 1, 1], [], []>} : vector<8x8xbf16>, vector<8x8xbf16>, vector<8x8xf32> -> vector<8x8xf32>
    %50 = tpu.reciprocal %46 {approx = true} : vector<8x1xf32> -> vector<8x1xf32>
    %51 = vector.broadcast %50 : vector<8x1xf32> to vector<8x8xf32>
    %52 = arith.mulf %49, %51 : vector<8x8xf32>
    %c0_20 = arith.constant 0 : index
    %c0_21 = arith.constant 0 : index
    %53 = vector.load %arg18[%c0_20, %c0_21] : memref<16x32xf32, #tpu.memory_space<vmem>>, vector<8x8xf32>
    tpu.vector_store %arg18[%c0_20, %c0_21], %52 {strides = array<i32>} : memref<16x32xf32, #tpu.memory_space<vmem>>, vector<8x8xf32>,
    %54 = vector.extract_strided_slice %33 {offsets = [0, 8], sizes = [8, 8], strides = [1, 1]} : vector<16x96xf32> to vector<8x8xf32>
    %55 = vector.extract_strided_slice %33 {offsets = [0, 40], sizes = [8, 8], strides = [1, 1]} : vector<16x96xf32> to vector<8x8xf32>
    %56 = vector.extract_strided_slice %33 {offsets = [0, 72], sizes = [8, 8], strides = [1, 1]} : vector<16x96xf32> to vector<8x8xf32>
    %57 = arith.truncf %54 : vector<8x8xf32> to vector<8x8xbf16>
    %58 = arith.truncf %55 : vector<8x8xf32> to vector<8x8xbf16>
    %cst_22 = arith.constant dense<0.000000e+00> : vector<8x8xf32>
    %59 = tpu.matmul %57, %58, %cst_22 {dimension_numbers = #tpu.dot_dimension_numbers<[1], [1], [0], [0], [0, 0, 1, 0], [], []>} : vector<8x8xbf16>, vector<8x8xbf16>, vector<8x8xf32> -> vector<8x8xf32>
    %cst_23 = arith.constant dense<0xFF800000> : vector<8xf32>
    %60 = vector.multi_reduction <maximumf>, %59, %cst_23 [1] : vector<8x8xf32> to vector<8xf32>
    %61 = vector.shape_cast %60 : vector<8xf32> to vector<8x1xf32>
    %62 = vector.broadcast %61 : vector<8x1xf32> to vector<8x8xf32>
    %63 = arith.subf %59, %62 : vector<8x8xf32>
    %64 = math.exp %63 : vector<8x8xf32>
    %cst_24 = arith.constant dense<0.000000e+00> : vector<8xf32>
    %65 = vector.multi_reduction <add>, %64, %cst_24 [1] : vector<8x8xf32> to vector<8xf32>
    %66 = vector.shape_cast %65 : vector<8xf32> to vector<8x1xf32>
    %67 = arith.truncf %64 : vector<8x8xf32> to vector<8x8xbf16>
    %68 = arith.truncf %56 : vector<8x8xf32> to vector<8x8xbf16>
    %cst_25 = arith.constant dense<0.000000e+00> : vector<8x8xf32>
    %69 = tpu.matmul %67, %68, %cst_25 {dimension_numbers = #tpu.dot_dimension_numbers<[1], [0], [0], [1], [0, 0, 1, 1], [], []>} : vector<8x8xbf16>, vector<8x8xbf16>, vector<8x8xf32> -> vector<8x8xf32>
    %70 = tpu.reciprocal %66 {approx = true} : vector<8x1xf32> -> vector<8x1xf32>
    %71 = vector.broadcast %70 : vector<8x1xf32> to vector<8x8xf32>
    %72 = arith.mulf %69, %71 : vector<8x8xf32>
    %c0_26 = arith.constant 0 : index
    %c8 = arith.constant 8 : index
    %73 = vector.load %arg18[%c0_26, %c8] : memref<16x32xf32, #tpu.memory_space<vmem>>, vector<8x8xf32>
    tpu.vector_store %arg18[%c0_26, %c8], %72 {strides = array<i32>} : memref<16x32xf32, #tpu.memory_space<vmem>>, vector<8x8xf32>,
    %74 = vector.extract_strided_slice %33 {offsets = [0, 16], sizes = [8, 8], strides = [1, 1]} : vector<16x96xf32> to vector<8x8xf32>
    %75 = vector.extract_strided_slice %33 {offsets = [0, 48], sizes = [8, 8], strides = [1, 1]} : vector<16x96xf32> to vector<8x8xf32>
    %76 = vector.extract_strided_slice %33 {offsets = [0, 80], sizes = [8, 8], strides = [1, 1]} : vector<16x96xf32> to vector<8x8xf32>
    %77 = arith.truncf %74 : vector<8x8xf32> to vector<8x8xbf16>
    %78 = arith.truncf %75 : vector<8x8xf32> to vector<8x8xbf16>
    %cst_27 = arith.constant dense<0.000000e+00> : vector<8x8xf32>
    %79 = tpu.matmul %77, %78, %cst_27 {dimension_numbers = #tpu.dot_dimension_numbers<[1], [1], [0], [0], [0, 0, 1, 0], [], []>} : vector<8x8xbf16>, vector<8x8xbf16>, vector<8x8xf32> -> vector<8x8xf32>
    %cst_28 = arith.constant dense<0xFF800000> : vector<8xf32>
    %80 = vector.multi_reduction <maximumf>, %79, %cst_28 [1] : vector<8x8xf32> to vector<8xf32>
    %81 = vector.shape_cast %80 : vector<8xf32> to vector<8x1xf32>
    %82 = vector.broadcast %81 : vector<8x1xf32> to vector<8x8xf32>
    %83 = arith.subf %79, %82 : vector<8x8xf32>
    %84 = math.exp %83 : vector<8x8xf32>
    %cst_29 = arith.constant dense<0.000000e+00> : vector<8xf32>
    %85 = vector.multi_reduction <add>, %84, %cst_29 [1] : vector<8x8xf32> to vector<8xf32>
    %86 = vector.shape_cast %85 : vector<8xf32> to vector<8x1xf32>
    %87 = arith.truncf %84 : vector<8x8xf32> to vector<8x8xbf16>
    %88 = arith.truncf %76 : vector<8x8xf32> to vector<8x8xbf16>
    %cst_30 = arith.constant dense<0.000000e+00> : vector<8x8xf32>
    %89 = tpu.matmul %87, %88, %cst_30 {dimension_numbers = #tpu.dot_dimension_numbers<[1], [0], [0], [1], [0, 0, 1, 1], [], []>} : vector<8x8xbf16>, vector<8x8xbf16>, vector<8x8xf32> -> vector<8x8xf32>
    %90 = tpu.reciprocal %86 {approx = true} : vector<8x1xf32> -> vector<8x1xf32>
    %91 = vector.broadcast %90 : vector<8x1xf32> to vector<8x8xf32>
    %92 = arith.mulf %89, %91 : vector<8x8xf32>
    %c0_31 = arith.constant 0 : index
    %c16 = arith.constant 16 : index
    %93 = vector.load %arg18[%c0_31, %c16] : memref<16x32xf32, #tpu.memory_space<vmem>>, vector<8x8xf32>
    tpu.vector_store %arg18[%c0_31, %c16], %92 {strides = array<i32>} : memref<16x32xf32, #tpu.memory_space<vmem>>, vector<8x8xf32>,
    %94 = vector.extract_strided_slice %33 {offsets = [0, 24], sizes = [8, 8], strides = [1, 1]} : vector<16x96xf32> to vector<8x8xf32>
    %95 = vector.extract_strided_slice %33 {offsets = [0, 56], sizes = [8, 8], strides = [1, 1]} : vector<16x96xf32> to vector<8x8xf32>
    %96 = vector.extract_strided_slice %33 {offsets = [0, 88], sizes = [8, 8], strides = [1, 1]} : vector<16x96xf32> to vector<8x8xf32>
    %97 = arith.truncf %94 : vector<8x8xf32> to vector<8x8xbf16>
    %98 = arith.truncf %95 : vector<8x8xf32> to vector<8x8xbf16>
    %cst_32 = arith.constant dense<0.000000e+00> : vector<8x8xf32>
    %99 = tpu.matmul %97, %98, %cst_32 {dimension_numbers = #tpu.dot_dimension_numbers<[1], [1], [0], [0], [0, 0, 1, 0], [], []>} : vector<8x8xbf16>, vector<8x8xbf16>, vector<8x8xf32> -> vector<8x8xf32>
    %cst_33 = arith.constant dense<0xFF800000> : vector<8xf32>
    %100 = vector.multi_reduction <maximumf>, %99, %cst_33 [1] : vector<8x8xf32> to vector<8xf32>
    %101 = vector.shape_cast %100 : vector<8xf32> to vector<8x1xf32>
    %102 = vector.broadcast %101 : vector<8x1xf32> to vector<8x8xf32>
    %103 = arith.subf %99, %102 : vector<8x8xf32>
    %104 = math.exp %103 : vector<8x8xf32>
    %cst_34 = arith.constant dense<0.000000e+00> : vector<8xf32>
    %105 = vector.multi_reduction <add>, %104, %cst_34 [1] : vector<8x8xf32> to vector<8xf32>
    %106 = vector.shape_cast %105 : vector<8xf32> to vector<8x1xf32>
    %107 = arith.truncf %104 : vector<8x8xf32> to vector<8x8xbf16>
    %108 = arith.truncf %96 : vector<8x8xf32> to vector<8x8xbf16>
    %cst_35 = arith.constant dense<0.000000e+00> : vector<8x8xf32>
    %109 = tpu.matmul %107, %108, %cst_35 {dimension_numbers = #tpu.dot_dimension_numbers<[1], [0], [0], [1], [0, 0, 1, 1], [], []>} : vector<8x8xbf16>, vector<8x8xbf16>, vector<8x8xf32> -> vector<8x8xf32>
    %110 = tpu.reciprocal %106 {approx = true} : vector<8x1xf32> -> vector<8x1xf32>
    %111 = vector.broadcast %110 : vector<8x1xf32> to vector<8x8xf32>
    %112 = arith.mulf %109, %111 : vector<8x8xf32>
    %c0_36 = arith.constant 0 : index
    %c24 = arith.constant 24 : index
    %113 = vector.load %arg18[%c0_36, %c24] : memref<16x32xf32, #tpu.memory_space<vmem>>, vector<8x8xf32>
    tpu.vector_store %arg18[%c0_36, %c24], %112 {strides = array<i32>} : memref<16x32xf32, #tpu.memory_space<vmem>>, vector<8x8xf32>,
    %114 = vector.extract_strided_slice %33 {offsets = [8, 0], sizes = [8, 8], strides = [1, 1]} : vector<16x96xf32> to vector<8x8xf32>
    %115 = vector.extract_strided_slice %33 {offsets = [8, 32], sizes = [8, 8], strides = [1, 1]} : vector<16x96xf32> to vector<8x8xf32>
    %116 = vector.extract_strided_slice %33 {offsets = [8, 64], sizes = [8, 8], strides = [1, 1]} : vector<16x96xf32> to vector<8x8xf32>
    %117 = arith.truncf %114 : vector<8x8xf32> to vector<8x8xbf16>
    %118 = arith.truncf %115 : vector<8x8xf32> to vector<8x8xbf16>
    %cst_37 = arith.constant dense<0.000000e+00> : vector<8x8xf32>
    %119 = tpu.matmul %117, %118, %cst_37 {dimension_numbers = #tpu.dot_dimension_numbers<[1], [1], [0], [0], [0, 0, 1, 0], [], []>} : vector<8x8xbf16>, vector<8x8xbf16>, vector<8x8xf32> -> vector<8x8xf32>
    %cst_38 = arith.constant dense<0xFF800000> : vector<8xf32>
    %120 = vector.multi_reduction <maximumf>, %119, %cst_38 [1] : vector<8x8xf32> to vector<8xf32>
    %121 = vector.shape_cast %120 : vector<8xf32> to vector<8x1xf32>
    %122 = vector.broadcast %121 : vector<8x1xf32> to vector<8x8xf32>
    %123 = arith.subf %119, %122 : vector<8x8xf32>
    %124 = math.exp %123 : vector<8x8xf32>
    %cst_39 = arith.constant dense<0.000000e+00> : vector<8xf32>
    %125 = vector.multi_reduction <add>, %124, %cst_39 [1] : vector<8x8xf32> to vector<8xf32>
    %126 = vector.shape_cast %125 : vector<8xf32> to vector<8x1xf32>
    %127 = arith.truncf %124 : vector<8x8xf32> to vector<8x8xbf16>
    %128 = arith.truncf %116 : vector<8x8xf32> to vector<8x8xbf16>
    %cst_40 = arith.constant dense<0.000000e+00> : vector<8x8xf32>
    %129 = tpu.matmul %127, %128, %cst_40 {dimension_numbers = #tpu.dot_dimension_numbers<[1], [0], [0], [1], [0, 0, 1, 1], [], []>} : vector<8x8xbf16>, vector<8x8xbf16>, vector<8x8xf32> -> vector<8x8xf32>
    %130 = tpu.reciprocal %126 {approx = true} : vector<8x1xf32> -> vector<8x1xf32>
    %131 = vector.broadcast %130 : vector<8x1xf32> to vector<8x8xf32>
    %132 = arith.mulf %129, %131 : vector<8x8xf32>
    %c8_41 = arith.constant 8 : index
    %c0_42 = arith.constant 0 : index
    %133 = vector.load %arg18[%c8_41, %c0_42] : memref<16x32xf32, #tpu.memory_space<vmem>>, vector<8x8xf32>
    tpu.vector_store %arg18[%c8_41, %c0_42], %132 {strides = array<i32>} : memref<16x32xf32, #tpu.memory_space<vmem>>, vector<8x8xf32>,
    %134 = vector.extract_strided_slice %33 {offsets = [8, 8], sizes = [8, 8], strides = [1, 1]} : vector<16x96xf32> to vector<8x8xf32>
    %135 = vector.extract_strided_slice %33 {offsets = [8, 40], sizes = [8, 8], strides = [1, 1]} : vector<16x96xf32> to vector<8x8xf32>
    %136 = vector.extract_strided_slice %33 {offsets = [8, 72], sizes = [8, 8], strides = [1, 1]} : vector<16x96xf32> to vector<8x8xf32>
    %137 = arith.truncf %134 : vector<8x8xf32> to vector<8x8xbf16>
    %138 = arith.truncf %135 : vector<8x8xf32> to vector<8x8xbf16>
    %cst_43 = arith.constant dense<0.000000e+00> : vector<8x8xf32>
    %139 = tpu.matmul %137, %138, %cst_43 {dimension_numbers = #tpu.dot_dimension_numbers<[1], [1], [0], [0], [0, 0, 1, 0], [], []>} : vector<8x8xbf16>, vector<8x8xbf16>, vector<8x8xf32> -> vector<8x8xf32>
    %cst_44 = arith.constant dense<0xFF800000> : vector<8xf32>
    %140 = vector.multi_reduction <maximumf>, %139, %cst_44 [1] : vector<8x8xf32> to vector<8xf32>
    %141 = vector.shape_cast %140 : vector<8xf32> to vector<8x1xf32>
    %142 = vector.broadcast %141 : vector<8x1xf32> to vector<8x8xf32>
    %143 = arith.subf %139, %142 : vector<8x8xf32>
    %144 = math.exp %143 : vector<8x8xf32>
    %cst_45 = arith.constant dense<0.000000e+00> : vector<8xf32>
    %145 = vector.multi_reduction <add>, %144, %cst_45 [1] : vector<8x8xf32> to vector<8xf32>
    %146 = vector.shape_cast %145 : vector<8xf32> to vector<8x1xf32>
    %147 = arith.truncf %144 : vector<8x8xf32> to vector<8x8xbf16>
    %148 = arith.truncf %136 : vector<8x8xf32> to vector<8x8xbf16>
    %cst_46 = arith.constant dense<0.000000e+00> : vector<8x8xf32>
    %149 = tpu.matmul %147, %148, %cst_46 {dimension_numbers = #tpu.dot_dimension_numbers<[1], [0], [0], [1], [0, 0, 1, 1], [], []>} : vector<8x8xbf16>, vector<8x8xbf16>, vector<8x8xf32> -> vector<8x8xf32>
    %150 = tpu.reciprocal %146 {approx = true} : vector<8x1xf32> -> vector<8x1xf32>
    %151 = vector.broadcast %150 : vector<8x1xf32> to vector<8x8xf32>
    %152 = arith.mulf %149, %151 : vector<8x8xf32>
    %c8_47 = arith.constant 8 : index
    %c8_48 = arith.constant 8 : index
    %153 = vector.load %arg18[%c8_47, %c8_48] : memref<16x32xf32, #tpu.memory_space<vmem>>, vector<8x8xf32>
    tpu.vector_store %arg18[%c8_47, %c8_48], %152 {strides = array<i32>} : memref<16x32xf32, #tpu.memory_space<vmem>>, vector<8x8xf32>,
    %154 = vector.extract_strided_slice %33 {offsets = [8, 16], sizes = [8, 8], strides = [1, 1]} : vector<16x96xf32> to vector<8x8xf32>
    %155 = vector.extract_strided_slice %33 {offsets = [8, 48], sizes = [8, 8], strides = [1, 1]} : vector<16x96xf32> to vector<8x8xf32>
    %156 = vector.extract_strided_slice %33 {offsets = [8, 80], sizes = [8, 8], strides = [1, 1]} : vector<16x96xf32> to vector<8x8xf32>
    %157 = arith.truncf %154 : vector<8x8xf32> to vector<8x8xbf16>
    %158 = arith.truncf %155 : vector<8x8xf32> to vector<8x8xbf16>
    %cst_49 = arith.constant dense<0.000000e+00> : vector<8x8xf32>
    %159 = tpu.matmul %157, %158, %cst_49 {dimension_numbers = #tpu.dot_dimension_numbers<[1], [1], [0], [0], [0, 0, 1, 0], [], []>} : vector<8x8xbf16>, vector<8x8xbf16>, vector<8x8xf32> -> vector<8x8xf32>
    %cst_50 = arith.constant dense<0xFF800000> : vector<8xf32>
    %160 = vector.multi_reduction <maximumf>, %159, %cst_50 [1] : vector<8x8xf32> to vector<8xf32>
    %161 = vector.shape_cast %160 : vector<8xf32> to vector<8x1xf32>
    %162 = vector.broadcast %161 : vector<8x1xf32> to vector<8x8xf32>
    %163 = arith.subf %159, %162 : vector<8x8xf32>
    %164 = math.exp %163 : vector<8x8xf32>
    %cst_51 = arith.constant dense<0.000000e+00> : vector<8xf32>
    %165 = vector.multi_reduction <add>, %164, %cst_51 [1] : vector<8x8xf32> to vector<8xf32>
    %166 = vector.shape_cast %165 : vector<8xf32> to vector<8x1xf32>
    %167 = arith.truncf %164 : vector<8x8xf32> to vector<8x8xbf16>
    %168 = arith.truncf %156 : vector<8x8xf32> to vector<8x8xbf16>
    %cst_52 = arith.constant dense<0.000000e+00> : vector<8x8xf32>
    %169 = tpu.matmul %167, %168, %cst_52 {dimension_numbers = #tpu.dot_dimension_numbers<[1], [0], [0], [1], [0, 0, 1, 1], [], []>} : vector<8x8xbf16>, vector<8x8xbf16>, vector<8x8xf32> -> vector<8x8xf32>
    %170 = tpu.reciprocal %166 {approx = true} : vector<8x1xf32> -> vector<8x1xf32>
    %171 = vector.broadcast %170 : vector<8x1xf32> to vector<8x8xf32>
    %172 = arith.mulf %169, %171 : vector<8x8xf32>
    %c8_53 = arith.constant 8 : index
    %c16_54 = arith.constant 16 : index
    %173 = vector.load %arg18[%c8_53, %c16_54] : memref<16x32xf32, #tpu.memory_space<vmem>>, vector<8x8xf32>
    tpu.vector_store %arg18[%c8_53, %c16_54], %172 {strides = array<i32>} : memref<16x32xf32, #tpu.memory_space<vmem>>, vector<8x8xf32>,
    %174 = vector.extract_strided_slice %33 {offsets = [8, 24], sizes = [8, 8], strides = [1, 1]} : vector<16x96xf32> to vector<8x8xf32>
    %175 = vector.extract_strided_slice %33 {offsets = [8, 56], sizes = [8, 8], strides = [1, 1]} : vector<16x96xf32> to vector<8x8xf32>
    %176 = vector.extract_strided_slice %33 {offsets = [8, 88], sizes = [8, 8], strides = [1, 1]} : vector<16x96xf32> to vector<8x8xf32>
    %177 = arith.truncf %174 : vector<8x8xf32> to vector<8x8xbf16>
    %178 = arith.truncf %175 : vector<8x8xf32> to vector<8x8xbf16>
    %cst_55 = arith.constant dense<0.000000e+00> : vector<8x8xf32>
    %179 = tpu.matmul %177, %178, %cst_55 {dimension_numbers = #tpu.dot_dimension_numbers<[1], [1], [0], [0], [0, 0, 1, 0], [], []>} : vector<8x8xbf16>, vector<8x8xbf16>, vector<8x8xf32> -> vector<8x8xf32>
    %cst_56 = arith.constant dense<0xFF800000> : vector<8xf32>
    %180 = vector.multi_reduction <maximumf>, %179, %cst_56 [1] : vector<8x8xf32> to vector<8xf32>
    %181 = vector.shape_cast %180 : vector<8xf32> to vector<8x1xf32>
    %182 = vector.broadcast %181 : vector<8x1xf32> to vector<8x8xf32>
    %183 = arith.subf %179, %182 : vector<8x8xf32>
    %184 = math.exp %183 : vector<8x8xf32>
    %cst_57 = arith.constant dense<0.000000e+00> : vector<8xf32>
    %185 = vector.multi_reduction <add>, %184, %cst_57 [1] : vector<8x8xf32> to vector<8xf32>
    %186 = vector.shape_cast %185 : vector<8xf32> to vector<8x1xf32>
    %187 = arith.truncf %184 : vector<8x8xf32> to vector<8x8xbf16>
    %188 = arith.truncf %176 : vector<8x8xf32> to vector<8x8xbf16>
    %cst_58 = arith.constant dense<0.000000e+00> : vector<8x8xf32>
    %189 = tpu.matmul %187, %188, %cst_58 {dimension_numbers = #tpu.dot_dimension_numbers<[1], [0], [0], [1], [0, 0, 1, 1], [], []>} : vector<8x8xbf16>, vector<8x8xbf16>, vector<8x8xf32> -> vector<8x8xf32>
    %190 = tpu.reciprocal %186 {approx = true} : vector<8x1xf32> -> vector<8x1xf32>
    %191 = vector.broadcast %190 : vector<8x1xf32> to vector<8x8xf32>
    %192 = arith.mulf %189, %191 : vector<8x8xf32>
    %c8_59 = arith.constant 8 : index
    %c24_60 = arith.constant 24 : index
    %193 = vector.load %arg18[%c8_59, %c24_60] : memref<16x32xf32, #tpu.memory_space<vmem>>, vector<8x8xf32>
    tpu.vector_store %arg18[%c8_59, %c24_60], %192 {strides = array<i32>} : memref<16x32xf32, #tpu.memory_space<vmem>>, vector<8x8xf32>,
    %c0_61 = arith.constant 0 : index
    %c0_62 = arith.constant 0 : index
    %194 = vector.load %arg18[%c0_61, %c0_62] : memref<16x32xf32, #tpu.memory_space<vmem>>, vector<16x32xf32>
    %195 = arith.truncf %194 : vector<16x32xf32> to vector<16x32xbf16>
    %c0_63 = arith.constant 0 : index
    %c0_64 = arith.constant 0 : index
    %c0_65 = arith.constant 0 : index
    %196 = vector.load %arg6[%c0_63, %c0_64, %c0_65] : memref<1x32x128xbf16, #tpu.memory_space<vmem>>, vector<1x32x128xbf16>
    %197 = vector.shape_cast %196 : vector<1x32x128xbf16> to vector<32x128xbf16>
    %cst_66 = arith.constant dense<0.000000e+00> : vector<16x128xf32>
    %198 = tpu.matmul %195, %197, %cst_66 {dimension_numbers = #tpu.dot_dimension_numbers<[1], [0], [0], [1], [0, 0, 1, 1], [], []>} : vector<16x32xbf16>, vector<32x128xbf16>, vector<16x128xf32> -> vector<16x128xf32>
    %199 = arith.addf %3, %198 : vector<16x128xf32>
    %c0_67 = arith.constant 0 : index
    %c0_68 = arith.constant 0 : index
    %c0_69 = arith.constant 0 : index
    %200 = vector.load %arg7[%c0_67, %c0_68, %c0_69] : memref<1x1x128xf32, #tpu.memory_space<vmem>>, vector<1x1x128xf32>
    %201 = vector.shape_cast %200 : vector<1x1x128xf32> to vector<1x128xf32>
    %202 = vector.broadcast %201 : vector<1x128xf32> to vector<16x128xf32>
    %203 = arith.addf %199, %202 : vector<16x128xf32>
    %c0_70 = arith.constant 0 : index
    %c0_71 = arith.constant 0 : index
    %c0_72 = arith.constant 0 : index
    %204 = vector.load %arg8[%c0_70, %c0_71, %c0_72] : memref<1x1x128xf32, #tpu.memory_space<vmem>>, vector<1x1x128xf32>
    %205 = vector.shape_cast %204 : vector<1x1x128xf32> to vector<1x128xf32>
    %c0_73 = arith.constant 0 : index
    %c0_74 = arith.constant 0 : index
    %c0_75 = arith.constant 0 : index
    %206 = vector.load %arg9[%c0_73, %c0_74, %c0_75] : memref<1x1x128xf32, #tpu.memory_space<vmem>>, vector<1x1x128xf32>
    %207 = vector.shape_cast %206 : vector<1x1x128xf32> to vector<1x128xf32>
    %cst_76 = arith.constant dense<0.000000e+00> : vector<16xf32>
    %208 = vector.multi_reduction <add>, %203, %cst_76 [1] : vector<16x128xf32> to vector<16xf32>
    %209 = vector.shape_cast %208 : vector<16xf32> to vector<16x1xf32>
    %cst_77 = arith.constant 3.125000e-02 : f32
    %210 = vector.broadcast %cst_77 : f32 to vector<16x1xf32>
    %211 = arith.mulf %209, %210 : vector<16x1xf32>
    %212 = arith.mulf %203, %203 : vector<16x128xf32>
    %cst_78 = arith.constant dense<0.000000e+00> : vector<16xf32>
    %213 = vector.multi_reduction <add>, %212, %cst_78 [1] : vector<16x128xf32> to vector<16xf32>
    %214 = vector.shape_cast %213 : vector<16xf32> to vector<16x1xf32>
    %cst_79 = arith.constant 3.125000e-02 : f32
    %215 = vector.broadcast %cst_79 : f32 to vector<16x1xf32>
    %216 = arith.mulf %214, %215 : vector<16x1xf32>
    %217 = arith.mulf %211, %211 : vector<16x1xf32>
    %218 = arith.subf %216, %217 : vector<16x1xf32>
    %219 = vector.broadcast %211 : vector<16x1xf32> to vector<16x128xf32>
    %220 = arith.subf %203, %219 : vector<16x128xf32>
    %cst_80 = arith.constant 9.99999974E-6 : f32
    %221 = vector.broadcast %cst_80 : f32 to vector<16x1xf32>
    %222 = arith.addf %218, %221 : vector<16x1xf32>
    %223 = math.rsqrt %222 : vector<16x1xf32>
    %224 = vector.broadcast %223 : vector<16x1xf32> to vector<16x128xf32>
    %225 = arith.mulf %220, %224 : vector<16x128xf32>
    %226 = vector.broadcast %205 : vector<1x128xf32> to vector<16x128xf32>
    %227 = arith.mulf %225, %226 : vector<16x128xf32>
    %228 = vector.broadcast %207 : vector<1x128xf32> to vector<16x128xf32>
    %229 = arith.addf %227, %228 : vector<16x128xf32>
    %230 = arith.truncf %229 : vector<16x128xf32> to vector<16x128xbf16>
    %cst_81 = arith.constant 0.000000e+00 : f32
    %231 = vector.broadcast %cst_81 : f32 to vector<16x128xf32>
    %c0_82 = arith.constant 0 : index
    %c0_83 = arith.constant 0 : index
    %c0_84 = arith.constant 0 : index
    %232 = vector.load %arg10[%c0_82, %c0_83, %c0_84] : memref<1x128x128xbf16, #tpu.memory_space<vmem>>, vector<1x128x128xbf16>
    %233 = vector.shape_cast %232 : vector<1x128x128xbf16> to vector<128x128xbf16>
    %cst_85 = arith.constant dense<0.000000e+00> : vector<16x128xf32>
    %234 = tpu.matmul %230, %233, %cst_85 {dimension_numbers = #tpu.dot_dimension_numbers<[1], [0], [0], [1], [0, 0, 1, 1], [], []>} : vector<16x128xbf16>, vector<128x128xbf16>, vector<16x128xf32> -> vector<16x128xf32>
    %c0_86 = arith.constant 0 : index
    %c0_87 = arith.constant 0 : index
    %c0_88 = arith.constant 0 : index
    %235 = vector.load %arg11[%c0_86, %c0_87, %c0_88] : memref<1x1x128xf32, #tpu.memory_space<vmem>>, vector<1x1x128xf32>
    %236 = vector.shape_cast %235 : vector<1x1x128xf32> to vector<1x128xf32>
    %237 = vector.broadcast %236 : vector<1x128xf32> to vector<16x128xf32>
    %238 = arith.addf %234, %237 : vector<16x128xf32>
    %cst_89 = arith.constant 5.000000e-01 : f32
    %239 = vector.broadcast %cst_89 : f32 to vector<16x128xf32>
    %240 = arith.mulf %239, %238 : vector<16x128xf32>
    %cst_90 = arith.constant 2.000000e+00 : f32
    %241 = math.sqrt %cst_90 : f32
    %242 = vector.broadcast %241 : f32 to vector<16x128xf32>
    %243 = arith.divf %238, %242 : vector<16x128xf32>
    %244 = math.erf %243 : vector<16x128xf32>
    %cst_91 = arith.constant 1.000000e+00 : f32
    %245 = vector.broadcast %cst_91 : f32 to vector<16x128xf32>
    %246 = arith.addf %245, %244 : vector<16x128xf32>
    %247 = arith.mulf %240, %246 : vector<16x128xf32>
    %248 = arith.truncf %247 : vector<16x128xf32> to vector<16x128xbf16>
    %c0_92 = arith.constant 0 : index
    %c0_93 = arith.constant 0 : index
    %c0_94 = arith.constant 0 : index
    %249 = vector.load %arg12[%c0_92, %c0_93, %c0_94] : memref<1x128x128xbf16, #tpu.memory_space<vmem>>, vector<1x128x128xbf16>
    %250 = vector.shape_cast %249 : vector<1x128x128xbf16> to vector<128x128xbf16>
    %cst_95 = arith.constant dense<0.000000e+00> : vector<16x128xf32>
    %251 = tpu.matmul %248, %250, %cst_95 {dimension_numbers = #tpu.dot_dimension_numbers<[1], [0], [0], [1], [0, 0, 1, 1], [], []>} : vector<16x128xbf16>, vector<128x128xbf16>, vector<16x128xf32> -> vector<16x128xf32>
    %252 = arith.addf %231, %251 : vector<16x128xf32>
    %253 = arith.addf %203, %252 : vector<16x128xf32>
    %c0_96 = arith.constant 0 : index
    %c0_97 = arith.constant 0 : index
    %c0_98 = arith.constant 0 : index
    %254 = vector.load %arg13[%c0_96, %c0_97, %c0_98] : memref<1x1x128xf32, #tpu.memory_space<vmem>>, vector<1x1x128xf32>
    %255 = vector.shape_cast %254 : vector<1x1x128xf32> to vector<1x128xf32>
    %256 = vector.broadcast %255 : vector<1x128xf32> to vector<16x128xf32>
    %257 = arith.addf %253, %256 : vector<16x128xf32>
    %c0_99 = arith.constant 0 : index
    %c0_100 = arith.constant 0 : index
    %258 = vector.load %arg17[%c0_99, %c0_100] : memref<16x128xf32, #tpu.memory_space<vmem>>, vector<16x128xf32>
    tpu.vector_store %arg17[%c0_99, %c0_100], %257 {strides = array<i32>} : memref<16x128xf32, #tpu.memory_space<vmem>>, vector<16x128xf32>,
    %c1_i32 = arith.constant 1 : i32
    %259 = arith.cmpi eq, %arg1, %c1_i32 : i32
    %260 = arith.extui %259 : i1 to i32
    %c0_i32_101 = arith.constant 0 : i32
    %261 = arith.cmpi ne, %260, %c0_i32_101 : i32
    scf.if %261 {
      %c0_102 = arith.constant 0 : index
      %c0_103 = arith.constant 0 : index
      %262 = vector.load %arg14[%c0_102, %c0_103] : memref<1x128xf32, #tpu.memory_space<vmem>>, vector<1x128xf32>
      %c0_104 = arith.constant 0 : index
      %c0_105 = arith.constant 0 : index
      %263 = vector.load %arg15[%c0_104, %c0_105] : memref<1x128xf32, #tpu.memory_space<vmem>>, vector<1x128xf32>
      %cst_106 = arith.constant dense<0.000000e+00> : vector<16xf32>
      %264 = vector.multi_reduction <add>, %257, %cst_106 [1] : vector<16x128xf32> to vector<16xf32>
      %265 = vector.shape_cast %264 : vector<16xf32> to vector<16x1xf32>
      %cst_107 = arith.constant 3.125000e-02 : f32
      %266 = vector.broadcast %cst_107 : f32 to vector<16x1xf32>
      %267 = arith.mulf %265, %266 : vector<16x1xf32>
      %268 = arith.mulf %257, %257 : vector<16x128xf32>
      %cst_108 = arith.constant dense<0.000000e+00> : vector<16xf32>
      %269 = vector.multi_reduction <add>, %268, %cst_108 [1] : vector<16x128xf32> to vector<16xf32>
      %270 = vector.shape_cast %269 : vector<16xf32> to vector<16x1xf32>
      %cst_109 = arith.constant 3.125000e-02 : f32
      %271 = vector.broadcast %cst_109 : f32 to vector<16x1xf32>
      %272 = arith.mulf %270, %271 : vector<16x1xf32>
      %273 = arith.mulf %267, %267 : vector<16x1xf32>
      %274 = arith.subf %272, %273 : vector<16x1xf32>
      %275 = vector.broadcast %267 : vector<16x1xf32> to vector<16x128xf32>
      %276 = arith.subf %257, %275 : vector<16x128xf32>
      %cst_110 = arith.constant 9.99999974E-6 : f32
      %277 = vector.broadcast %cst_110 : f32 to vector<16x1xf32>
      %278 = arith.addf %274, %277 : vector<16x1xf32>
      %279 = math.rsqrt %278 : vector<16x1xf32>
      %280 = vector.broadcast %279 : vector<16x1xf32> to vector<16x128xf32>
      %281 = arith.mulf %276, %280 : vector<16x128xf32>
      %282 = vector.broadcast %262 : vector<1x128xf32> to vector<16x128xf32>
      %283 = arith.mulf %281, %282 : vector<16x128xf32>
      %284 = vector.broadcast %263 : vector<1x128xf32> to vector<16x128xf32>
      %285 = arith.addf %283, %284 : vector<16x128xf32>
      %286 = vector.extract_strided_slice %285 {offsets = [0, 0], sizes = [8, 128], strides = [1, 1]} : vector<16x128xf32> to vector<8x128xf32>
      %c0_111 = arith.constant 0 : index
      %c0_112 = arith.constant 0 : index
      %c0_113 = arith.constant 0 : index
      %287 = vector.load %arg16[%c0_111, %c0_112, %c0_113] : memref<2x8x128xf32, #tpu.memory_space<vmem>>, vector<1x8x128xf32>
      %288 = vector.shape_cast %287 : vector<1x8x128xf32> to vector<8x128xf32>
      %289 = vector.shape_cast %286 : vector<8x128xf32> to vector<1x8x128xf32>
      tpu.vector_store %arg16[%c0_111, %c0_112, %c0_113], %289 {strides = array<i32>} : memref<2x8x128xf32, #tpu.memory_space<vmem>>, vector<1x8x128xf32>,
      %290 = vector.extract_strided_slice %285 {offsets = [8, 0], sizes = [8, 128], strides = [1, 1]} : vector<16x128xf32> to vector<8x128xf32>
      %c1 = arith.constant 1 : index
      %c0_114 = arith.constant 0 : index
      %c0_115 = arith.constant 0 : index
      %291 = vector.load %arg16[%c1, %c0_114, %c0_115] : memref<2x8x128xf32, #tpu.memory_space<vmem>>, vector<1x8x128xf32>
      %292 = vector.shape_cast %291 : vector<1x8x128xf32> to vector<8x128xf32>
      %293 = vector.shape_cast %290 : vector<8x128xf32> to vector<1x8x128xf32>
      tpu.vector_store %arg16[%c1, %c0_114, %c0_115], %293 {strides = array<i32>} : memref<2x8x128xf32, #tpu.memory_space<vmem>>, vector<1x8x128xf32>,
    } else {
    }
    return
  }
  func.func @transform_0(%arg0: i32, %arg1: i32) -> (i32, i32, i32) {
    %c0_i32 = arith.constant 0 : i32
    %c0_i32_0 = arith.constant 0 : i32
    %c0_i32_1 = arith.constant 0 : i32
    return %arg0, %c0_i32, %c0_i32_0 : i32, i32, i32
  }
  func.func @transform_1(%arg0: i32, %arg1: i32) -> (i32, i32, i32) {
    %c0_i32 = arith.constant 0 : i32
    %c0_i32_0 = arith.constant 0 : i32
    %c0_i32_1 = arith.constant 0 : i32
    return %arg1, %c0_i32, %c0_i32_0 : i32, i32, i32
  }
  func.func @transform_2(%arg0: i32, %arg1: i32) -> (i32, i32, i32) {
    %c0_i32 = arith.constant 0 : i32
    %c0_i32_0 = arith.constant 0 : i32
    %c0_i32_1 = arith.constant 0 : i32
    return %arg1, %c0_i32, %c0_i32_0 : i32, i32, i32
  }
  func.func @transform_3(%arg0: i32, %arg1: i32) -> (i32, i32, i32) {
    %c0_i32 = arith.constant 0 : i32
    %c0_i32_0 = arith.constant 0 : i32
    %c0_i32_1 = arith.constant 0 : i32
    return %arg1, %c0_i32, %c0_i32_0 : i32, i32, i32
  }
  func.func @transform_4(%arg0: i32, %arg1: i32) -> (i32, i32, i32) {
    %c0_i32 = arith.constant 0 : i32
    %c0_i32_0 = arith.constant 0 : i32
    %c0_i32_1 = arith.constant 0 : i32
    return %arg1, %c0_i32, %c0_i32_0 : i32, i32, i32
  }
  func.func @transform_5(%arg0: i32, %arg1: i32) -> (i32, i32, i32) {
    %c0_i32 = arith.constant 0 : i32
    %c0_i32_0 = arith.constant 0 : i32
    %c0_i32_1 = arith.constant 0 : i32
    return %arg1, %c0_i32, %c0_i32_0 : i32, i32, i32
  }
  func.func @transform_6(%arg0: i32, %arg1: i32) -> (i32, i32, i32) {
    %c0_i32 = arith.constant 0 : i32
    %c0_i32_0 = arith.constant 0 : i32
    %c0_i32_1 = arith.constant 0 : i32
    return %arg1, %c0_i32, %c0_i32_0 : i32, i32, i32
  }
  func.func @transform_7(%arg0: i32, %arg1: i32) -> (i32, i32, i32) {
    %c0_i32 = arith.constant 0 : i32
    %c0_i32_0 = arith.constant 0 : i32
    %c0_i32_1 = arith.constant 0 : i32
    return %arg1, %c0_i32, %c0_i32_0 : i32, i32, i32
  }
  func.func @transform_8(%arg0: i32, %arg1: i32) -> (i32, i32, i32) {
    %c0_i32 = arith.constant 0 : i32
    %c0_i32_0 = arith.constant 0 : i32
    %c0_i32_1 = arith.constant 0 : i32
    return %arg1, %c0_i32, %c0_i32_0 : i32, i32, i32
  }
  func.func @transform_9(%arg0: i32, %arg1: i32) -> (i32, i32, i32) {
    %c0_i32 = arith.constant 0 : i32
    %c0_i32_0 = arith.constant 0 : i32
    %c0_i32_1 = arith.constant 0 : i32
    return %arg1, %c0_i32, %c0_i32_0 : i32, i32, i32
  }
  func.func @transform_10(%arg0: i32, %arg1: i32) -> (i32, i32, i32) {
    %c0_i32 = arith.constant 0 : i32
    %c0_i32_0 = arith.constant 0 : i32
    %c0_i32_1 = arith.constant 0 : i32
    return %arg1, %c0_i32, %c0_i32_0 : i32, i32, i32
  }
  func.func @transform_11(%arg0: i32, %arg1: i32) -> (i32, i32, i32) {
    %c0_i32 = arith.constant 0 : i32
    %c0_i32_0 = arith.constant 0 : i32
    %c0_i32_1 = arith.constant 0 : i32
    return %arg1, %c0_i32, %c0_i32_0 : i32, i32, i32
  }
  func.func @transform_12(%arg0: i32, %arg1: i32) -> (i32, i32) {
    %c0_i32 = arith.constant 0 : i32
    %c0_i32_0 = arith.constant 0 : i32
    %c0_i32_1 = arith.constant 0 : i32
    return %c0_i32, %c0_i32_0 : i32, i32
  }
  func.func @transform_13(%arg0: i32, %arg1: i32) -> (i32, i32) {
    %c0_i32 = arith.constant 0 : i32
    %c0_i32_0 = arith.constant 0 : i32
    %c0_i32_1 = arith.constant 0 : i32
    return %c0_i32, %c0_i32_0 : i32, i32
  }
  func.func @transform_14(%arg0: i32, %arg1: i32) -> (i32, i32, i32) {
    %c0_i32 = arith.constant 0 : i32
    %c0_i32_0 = arith.constant 0 : i32
    %c0_i32_1 = arith.constant 0 : i32
    return %arg0, %c0_i32, %c0_i32_0 : i32, i32, i32
  }
}

</mosaic_0001>

<llo_original>
// kernel: transformer_forward.1
$region0: #{transformer_forward.1}
  #allocation0 [shape = 'u32[]', space=smem, size = 0x4, offset = 0x4, fixed_abs, tag = 'smem constant byte address 0x4 - core index']
  #allocation1 [shape = 'u32[144,128]{1,0:T(1,128)}', space=vmem, size = 0x12000, scoped, tag = 'internal scratch']
  #allocation2 [shape = 'f32[16,128]{1,0:T(8,128)}', space=vmem, size = 0x2000, scoped, tag = 'scratch operand']
  #allocation3 [shape = 'f32[16,32]{1,0:T(8,128)}', space=vmem, size = 0x2000, scoped, tag = 'scratch operand']
  %s0 = inlined_call_operand.vmem [shape: f32[2,8,128], index: 0, kind: input, shape index: {}]
  %s1 = inlined_call_operand.vmem [shape: f32[2,1,128], index: 1, kind: input, shape index: {}]
  %s2 = inlined_call_operand.hbm [shape: f32[2,1,128], index: 2, kind: input, shape index: {}]
  %s3 = inlined_call_operand.vmem [shape: bf16[2,128,96], index: 3, kind: input, shape index: {}]
  %s4 = inlined_call_operand.hbm [shape: bf16[2,32,128], index: 4, kind: input, shape index: {}]
  %s5 = inlined_call_operand.vmem [shape: f32[2,1,128], index: 5, kind: input, shape index: {}]
  %s6 = inlined_call_operand.vmem [shape: f32[2,1,128], index: 6, kind: input, shape index: {}]
  %s7 = inlined_call_operand.hbm [shape: f32[2,1,128], index: 7, kind: input, shape index: {}]
  %s8 = inlined_call_operand.vmem [shape: bf16[2,128,128], index: 8, kind: input, shape index: {}]
  %s9 = inlined_call_operand.vmem [shape: f32[2,1,128], index: 9, kind: input, shape index: {}]
  %s10 = inlined_call_operand.vmem [shape: bf16[2,128,128], index: 10, kind: input, shape index: {}]
  %s11 = inlined_call_operand.vmem [shape: f32[2,1,128], index: 11, kind: input, shape index: {}]
  %s12 = inlined_call_operand.vmem [shape: f32[1,128], index: 12, kind: input, shape index: {}]
  %s13 = inlined_call_operand.hbm [shape: f32[1,128], index: 13, kind: input, shape index: {}]
  %s14 = inlined_call_operand.hbm [shape: f32[2,8,128], index: 14, kind: output, shape index: {}]
  %s15 = sld [smem:[#allocation0]]
  $region113: #{transformer_forward.1} parent=0
    _
  %s17 = ssub.s32 1, %s15
  %s18 = scalar_select 0, %s17, %s15
  $region1: #{transformer_forward.1} parent=0
    #allocation4 [shape = 'u8[1024]{0}', space=vmem, size = 0x400, scoped, tag = 'input window, operand 2']
    #allocation5 [shape = 's32[2]{0}', space=sflag, size = 0x8, scoped, tag = 'scoped memory for transformer_forward.1']
    #allocation6 [shape = 's32[2]{0}', space=sflag, size = 0x8, scoped, tag = 'scoped memory for transformer_forward.1']
    #allocation7 [shape = 'u8[16384]{0}', space=vmem, size = 0x4000, scoped, tag = 'input window, operand 4']
    #allocation8 [shape = 's32[2]{0}', space=sflag, size = 0x8, scoped, tag = 'scoped memory for transformer_forward.1']
    #allocation9 [shape = 'u8[1024]{0}', space=vmem, size = 0x400, scoped, tag = 'input window, operand 7']
    #allocation10 [shape = 'u8[512]{0}', space=vmem, size = 0x400, scoped, tag = 'input window, operand 13, single buffered']
    #allocation11 [shape = 's32[1]{0}', space=sflag, size = 0x4, scoped, tag = 'scoped memory for transformer_forward.1']
    #allocation12 [shape = 'u8[8192]{0}', space=vmem, size = 0x2000, scoped, tag = 'output window, operand 0, single buffered']
    %19 = vsyncpa [#allocation5], 0
    %s20 = scalar_lea.sflag [#allocation5], 1
    %21 = vsyncpa %s20, 0
    %22 = vsyncpa [#allocation8], 0
    %s23 = scalar_lea.sflag [#allocation8], 1
    %24 = vsyncpa %s23, 0
    %25 = vsyncpa [#allocation11], 0
    %26 = vsyncpa [#allocation6], 0
    loop: start=0, step=1, limit=4
    $region2: #{transformer_forward.1} parent=1 // loop_pre_header
      _
    $region3: #{transformer_forward.1} parent=1 // loop_header
      %s28 = sphi 0, %s32
      %p29 = scmp.ge.s32.totalorder %s28, 4
      %s35 = sphi 0, %s47
      %s36 = sphi 0, %s43
      %s37 = sphi 0, %s35
      %s38 = sphi 0, %s36
      %s39 = sphi 0, %s37
      %s40 = sphi 0, %s38
      %s50 = sphi 0, %s52
      %s53 = sphi 0, %s50
      %s54 = sphi 0, %s53
      %s70 = sphi 0, %s54
      %s76 = sphi 0, %s78
      %s79 = sphi 0, %s76
      %s80 = sphi 0, %s79
      %s96 = sphi 0, %s80
      %s102 = sphi 0, %s104
      %s105 = sphi 0, %s102
      %s106 = sphi 0, %s105
      %s122 = sphi 0, %s106
      %s128 = sphi 0, %s130
      %s131 = sphi 0, %s128
      %s132 = sphi 0, %s131
      %s148 = sphi 0, %s132
      %s154 = sphi 0, %s156
      %s157 = sphi 0, %s154
      %s158 = sphi 0, %s157
      %s174 = sphi 0, %s158
      %s180 = sphi 0, %s182
      %s183 = sphi 0, %s180
      %s184 = sphi 0, %s183
      %s200 = sphi 0, %s184
      %s206 = sphi 0, %s208
      %s209 = sphi 0, %s206
      %s210 = sphi 0, %s209
      %s226 = sphi 0, %s210
      %s232 = sphi 0, %s234
      %s235 = sphi 0, %s232
      %s236 = sphi 0, %s235
      %s252 = sphi 0, %s236
      %s258 = sphi 0, %s260
      %s261 = sphi 0, %s258
      %s262 = sphi 0, %s261
      %s278 = sphi 0, %s262
      %s284 = sphi 0, %s286
      %s287 = sphi 0, %s284
      %s288 = sphi 0, %s287
      %s304 = sphi 0, %s288
      %s310 = sphi 0, %s312
      %s313 = sphi 0, %s310
      %s314 = sphi 0, %s313
      %s330 = sphi 0, %s314
      %s336 = sphi 0, %s338
      %s339 = sphi 0, %s336
      %s340 = sphi 0, %s339
      %s356 = sphi 0, %s340
      %s360 = sphi 0, %s360
      %s362 = sphi 0, %s360
      %s363 = sphi 0, %s362
      %s377 = sphi 0, %s363
      %s381 = sphi 0, %s381
      %s383 = sphi 0, %s381
      %s384 = sphi 0, %s383
      %s398 = sphi 0, %s384
      %s404 = sphi 0, %s406
      %s407 = sphi 0, %s404
      %s408 = sphi 0, %s407
      %s424 = sphi 0, %s408
    $region4: #{transformer_forward.1} parent=1 // loop_header_branch
      %31 = sbr.rel (%p29) target = $region8
    $region5: #{transformer_forward.1} parent=1 // loop_body
      %s33 = ssub.s32 %s28, 1
      %s34 = ssub.s32 %s28, 2
      %s41 = sadd.s32 1, %s36
      %p42 = scmp.ge.s32.totalorder %s41, 2
      %s43 = scalar_select %p42, 0, %s41
      %s44 = sadd.s32 1, %s35
      %s45 = scalar_select %p42, %s44, %s35
      %p46 = scmp.ge.s32.totalorder %s45, 1
      %s47 = scalar_select %p46, 0, %s45
      %s48 = ssub.s32 %s35, %s47
      %p49 = scmp.eq.s32.totalorder %s48, 0
      %s51 = sadd.s32 %s50, 1
      %s52 = scalar_select %p49, %s50, %s51
      %p55 = pneg %p49
      %p56 = scmp.eq.s32.totalorder %s28, 1
      %p57 = por %p55, %p56
      %p58 = scmp.ne.s32.totalorder %s50, %s53
      %p59 = scmp.eq.s32.totalorder %s28, 0
      %p60 = por %p58, %p59
      %p61 = scmp.ne.s32.totalorder %s50, %s53
      %p62 = scmp.eq.s32.totalorder %s33, 1
      %p63 = por %p61, %p62
      %p64 = scmp.ne.s32.totalorder %s53, %s54
      %p65 = scmp.eq.s32.totalorder %s33, 0
      %p66 = por %p64, %p65
      %p67 = scmp.ne.s32.totalorder %s53, %s54
      %p68 = scmp.eq.s32.totalorder %s34, 1
      %p69 = por %p67, %p68
      %p71 = scmp.ne.s32.totalorder %s54, %s70
      %p72 = scmp.eq.s32.totalorder %s34, 0
      %p73 = por %p71, %p72
      %s74 = ssub.s32 %s36, %s43
      %p75 = scmp.eq.s32.totalorder %s74, 0
      %s77 = sadd.s32 %s76, 1
      %s78 = scalar_select %p75, %s76, %s77
      %p81 = pneg %p75
      %p82 = scmp.eq.s32.totalorder %s28, 1
      %p83 = por %p81, %p82
      %p84 = scmp.ne.s32.totalorder %s76, %s79
      %p85 = scmp.eq.s32.totalorder %s28, 0
      %p86 = por %p84, %p85
      %p87 = scmp.ne.s32.totalorder %s76, %s79
      %p88 = scmp.eq.s32.totalorder %s33, 1
      %p89 = por %p87, %p88
      %p90 = scmp.ne.s32.totalorder %s79, %s80
      %p91 = scmp.eq.s32.totalorder %s33, 0
      %p92 = por %p90, %p91
      %p93 = scmp.ne.s32.totalorder %s79, %s80
      %p94 = scmp.eq.s32.totalorder %s34, 1
      %p95 = por %p93, %p94
      %p97 = scmp.ne.s32.totalorder %s80, %s96
      %p98 = scmp.eq.s32.totalorder %s34, 0
      %p99 = por %p97, %p98
      %s100 = ssub.s32 %s36, %s43
      %p101 = scmp.eq.s32.totalorder %s100, 0
      %s103 = sadd.s32 %s102, 1
      %s104 = scalar_select %p101, %s102, %s103
      %p107 = pneg %p101
      %p108 = scmp.eq.s32.totalorder %s28, 1
      %p109 = por %p107, %p108
      %p110 = scmp.ne.s32.totalorder %s102, %s105
      %p111 = scmp.eq.s32.totalorder %s28, 0
      %p112 = por %p110, %p111
      %p113 = scmp.ne.s32.totalorder %s102, %s105
      %p114 = scmp.eq.s32.totalorder %s33, 1
      %p115 = por %p113, %p114
      %p116 = scmp.ne.s32.totalorder %s105, %s106
      %p117 = scmp.eq.s32.totalorder %s33, 0
      %p118 = por %p116, %p117
      %p119 = scmp.ne.s32.totalorder %s105, %s106
      %p120 = scmp.eq.s32.totalorder %s34, 1
      %p121 = por %p119, %p120
      %p123 = scmp.ne.s32.totalorder %s106, %s122
      %p124 = scmp.eq.s32.totalorder %s34, 0
      %p125 = por %p123, %p124
      %s126 = ssub.s32 %s36, %s43
      %p127 = scmp.eq.s32.totalorder %s126, 0
      %s129 = sadd.s32 %s128, 1
      %s130 = scalar_select %p127, %s128, %s129
      %p133 = pneg %p127
      %p134 = scmp.eq.s32.totalorder %s28, 1
      %p135 = por %p133, %p134
      %p136 = scmp.ne.s32.totalorder %s128, %s131
      %p137 = scmp.eq.s32.totalorder %s28, 0
      %p138 = por %p136, %p137
      %p139 = scmp.ne.s32.totalorder %s128, %s131
      %p140 = scmp.eq.s32.totalorder %s33, 1
      %p141 = por %p139, %p140
      %p142 = scmp.ne.s32.totalorder %s131, %s132
      %p143 = scmp.eq.s32.totalorder %s33, 0
      %p144 = por %p142, %p143
      %p145 = scmp.ne.s32.totalorder %s131, %s132
      %p146 = scmp.eq.s32.totalorder %s34, 1
      %p147 = por %p145, %p146
      %p149 = scmp.ne.s32.totalorder %s132, %s148
      %p150 = scmp.eq.s32.totalorder %s34, 0
      %p151 = por %p149, %p150
      %s152 = ssub.s32 %s36, %s43
      %p153 = scmp.eq.s32.totalorder %s152, 0
      %s155 = sadd.s32 %s154, 1
      %s156 = scalar_select %p153, %s154, %s155
      %p159 = pneg %p153
      %p160 = scmp.eq.s32.totalorder %s28, 1
      %p161 = por %p159, %p160
      %p162 = scmp.ne.s32.totalorder %s154, %s157
      %p163 = scmp.eq.s32.totalorder %s28, 0
      %p164 = por %p162, %p163
      %p165 = scmp.ne.s32.totalorder %s154, %s157
      %p166 = scmp.eq.s32.totalorder %s33, 1
      %p167 = por %p165, %p166
      %p168 = scmp.ne.s32.totalorder %s157, %s158
      %p169 = scmp.eq.s32.totalorder %s33, 0
      %p170 = por %p168, %p169
      %p171 = scmp.ne.s32.totalorder %s157, %s158
      %p172 = scmp.eq.s32.totalorder %s34, 1
      %p173 = por %p171, %p172
      %p175 = scmp.ne.s32.totalorder %s158, %s174
      %p176 = scmp.eq.s32.totalorder %s34, 0
      %p177 = por %p175, %p176
      %s178 = ssub.s32 %s36, %s43
      %p179 = scmp.eq.s32.totalorder %s178, 0
      %s181 = sadd.s32 %s180, 1
      %s182 = scalar_select %p179, %s180, %s181
      %p185 = pneg %p179
      %p186 = scmp.eq.s32.totalorder %s28, 1
      %p187 = por %p185, %p186
      %p188 = scmp.ne.s32.totalorder %s180, %s183
      %p189 = scmp.eq.s32.totalorder %s28, 0
      %p190 = por %p188, %p189
      %p191 = scmp.ne.s32.totalorder %s180, %s183
      %p192 = scmp.eq.s32.totalorder %s33, 1
      %p193 = por %p191, %p192
      %p194 = scmp.ne.s32.totalorder %s183, %s184
      %p195 = scmp.eq.s32.totalorder %s33, 0
      %p196 = por %p194, %p195
      %p197 = scmp.ne.s32.totalorder %s183, %s184
      %p198 = scmp.eq.s32.totalorder %s34, 1
      %p199 = por %p197, %p198
      %p201 = scmp.ne.s32.totalorder %s184, %s200
      %p202 = scmp.eq.s32.totalorder %s34, 0
      %p203 = por %p201, %p202
      %s204 = ssub.s32 %s36, %s43
      %p205 = scmp.eq.s32.totalorder %s204, 0
      %s207 = sadd.s32 %s206, 1
      %s208 = scalar_select %p205, %s206, %s207
      %p211 = pneg %p205
      %p212 = scmp.eq.s32.totalorder %s28, 1
      %p213 = por %p211, %p212
      %p214 = scmp.ne.s32.totalorder %s206, %s209
      %p215 = scmp.eq.s32.totalorder %s28, 0
      %p216 = por %p214, %p215
      %p217 = scmp.ne.s32.totalorder %s206, %s209
      %p218 = scmp.eq.s32.totalorder %s33, 1
      %p219 = por %p217, %p218
      %p220 = scmp.ne.s32.totalorder %s209, %s210
      %p221 = scmp.eq.s32.totalorder %s33, 0
      %p222 = por %p220, %p221
      %p223 = scmp.ne.s32.totalorder %s209, %s210
      %p224 = scmp.eq.s32.totalorder %s34, 1
      %p225 = por %p223, %p224
      %p227 = scmp.ne.s32.totalorder %s210, %s226
      %p228 = scmp.eq.s32.totalorder %s34, 0
      %p229 = por %p227, %p228
      %s230 = ssub.s32 %s36, %s43
      %p231 = scmp.eq.s32.totalorder %s230, 0
      %s233 = sadd.s32 %s232, 1
      %s234 = scalar_select %p231, %s232, %s233
      %p237 = pneg %p231
      %p238 = scmp.eq.s32.totalorder %s28, 1
      %p239 = por %p237, %p238
      %p240 = scmp.ne.s32.totalorder %s232, %s235
      %p241 = scmp.eq.s32.totalorder %s28, 0
      %p242 = por %p240, %p241
      %p243 = scmp.ne.s32.totalorder %s232, %s235
      %p244 = scmp.eq.s32.totalorder %s33, 1
      %p245 = por %p243, %p244
      %p246 = scmp.ne.s32.totalorder %s235, %s236
      %p247 = scmp.eq.s32.totalorder %s33, 0
      %p248 = por %p246, %p247
      %p249 = scmp.ne.s32.totalorder %s235, %s236
      %p250 = scmp.eq.s32.totalorder %s34, 1
      %p251 = por %p249, %p250
      %p253 = scmp.ne.s32.totalorder %s236, %s252
      %p254 = scmp.eq.s32.totalorder %s34, 0
      %p255 = por %p253, %p254
      %s256 = ssub.s32 %s36, %s43
      %p257 = scmp.eq.s32.totalorder %s256, 0
      %s259 = sadd.s32 %s258, 1
      %s260 = scalar_select %p257, %s258, %s259
      %p263 = pneg %p257
      %p264 = scmp.eq.s32.totalorder %s28, 1
      %p265 = por %p263, %p264
      %p266 = scmp.ne.s32.totalorder %s258, %s261
      %p267 = scmp.eq.s32.totalorder %s28, 0
      %p268 = por %p266, %p267
      %p269 = scmp.ne.s32.totalorder %s258, %s261
      %p270 = scmp.eq.s32.totalorder %s33, 1
      %p271 = por %p269, %p270
      %p272 = scmp.ne.s32.totalorder %s261, %s262
      %p273 = scmp.eq.s32.totalorder %s33, 0
      %p274 = por %p272, %p273
      %p275 = scmp.ne.s32.totalorder %s261, %s262
      %p276 = scmp.eq.s32.totalorder %s34, 1
      %p277 = por %p275, %p276
      %p279 = scmp.ne.s32.totalorder %s262, %s278
      %p280 = scmp.eq.s32.totalorder %s34, 0
      %p281 = por %p279, %p280
      %s282 = ssub.s32 %s36, %s43
      %p283 = scmp.eq.s32.totalorder %s282, 0
      %s285 = sadd.s32 %s284, 1
      %s286 = scalar_select %p283, %s284, %s285
      %p289 = pneg %p283
      %p290 = scmp.eq.s32.totalorder %s28, 1
      %p291 = por %p289, %p290
      %p292 = scmp.ne.s32.totalorder %s284, %s287
      %p293 = scmp.eq.s32.totalorder %s28, 0
      %p294 = por %p292, %p293
      %p295 = scmp.ne.s32.totalorder %s284, %s287
      %p296 = scmp.eq.s32.totalorder %s33, 1
      %p297 = por %p295, %p296
      %p298 = scmp.ne.s32.totalorder %s287, %s288
      %p299 = scmp.eq.s32.totalorder %s33, 0
      %p300 = por %p298, %p299
      %p301 = scmp.ne.s32.totalorder %s287, %s288
      %p302 = scmp.eq.s32.totalorder %s34, 1
      %p303 = por %p301, %p302
      %p305 = scmp.ne.s32.totalorder %s288, %s304
      %p306 = scmp.eq.s32.totalorder %s34, 0
      %p307 = por %p305, %p306
      %s308 = ssub.s32 %s36, %s43
      %p309 = scmp.eq.s32.totalorder %s308, 0
      %s311 = sadd.s32 %s310, 1
      %s312 = scalar_select %p309, %s310, %s311
      %p315 = pneg %p309
      %p316 = scmp.eq.s32.totalorder %s28, 1
      %p317 = por %p315, %p316
      %p318 = scmp.ne.s32.totalorder %s310, %s313
      %p319 = scmp.eq.s32.totalorder %s28, 0
      %p320 = por %p318, %p319
      %p321 = scmp.ne.s32.totalorder %s310, %s313
      %p322 = scmp.eq.s32.totalorder %s33, 1
      %p323 = por %p321, %p322
      %p324 = scmp.ne.s32.totalorder %s313, %s314
      %p325 = scmp.eq.s32.totalorder %s33, 0
      %p326 = por %p324, %p325
      %p327 = scmp.ne.s32.totalorder %s313, %s314
      %p328 = scmp.eq.s32.totalorder %s34, 1
      %p329 = por %p327, %p328
      %p331 = scmp.ne.s32.totalorder %s314, %s330
      %p332 = scmp.eq.s32.totalorder %s34, 0
      %p333 = por %p331, %p332
      %s334 = ssub.s32 %s36, %s43
      %p335 = scmp.eq.s32.totalorder %s334, 0
      %s337 = sadd.s32 %s336, 1
      %s338 = scalar_select %p335, %s336, %s337
      %p341 = pneg %p335
      %p342 = scmp.eq.s32.totalorder %s28, 1
      %p343 = por %p341, %p342
      %p344 = scmp.ne.s32.totalorder %s336, %s339
      %p345 = scmp.eq.s32.totalorder %s28, 0
      %p346 = por %p344, %p345
      %p347 = scmp.ne.s32.totalorder %s336, %s339
      %p348 = scmp.eq.s32.totalorder %s33, 1
      %p349 = por %p347, %p348
      %p350 = scmp.ne.s32.totalorder %s339, %s340
      %p351 = scmp.eq.s32.totalorder %s33, 0
      %p352 = por %p350, %p351
      %p353 = scmp.ne.s32.totalorder %s339, %s340
      %p354 = scmp.eq.s32.totalorder %s34, 1
      %p355 = por %p353, %p354
      %p357 = scmp.ne.s32.totalorder %s340, %s356
      %p358 = scmp.eq.s32.totalorder %s34, 0
      %p359 = por %p357, %p358
      %s361 = sadd.s32 %s360, 1
      %p364 = scmp.eq.s32.totalorder %s28, 1
      %p365 = scmp.ne.s32.totalorder %s360, %s362
      %p366 = scmp.eq.s32.totalorder %s28, 0
      %p367 = por %p365, %p366
      %p368 = scmp.ne.s32.totalorder %s360, %s362
      %p369 = scmp.eq.s32.totalorder %s33, 1
      %p370 = por %p368, %p369
      %p371 = scmp.ne.s32.totalorder %s362, %s363
      %p372 = scmp.eq.s32.totalorder %s33, 0
      %p373 = por %p371, %p372
      %p374 = scmp.ne.s32.totalorder %s362, %s363
      %p375 = scmp.eq.s32.totalorder %s34, 1
      %p376 = por %p374, %p375
      %p378 = scmp.ne.s32.totalorder %s363, %s377
      %p379 = scmp.eq.s32.totalorder %s34, 0
      %p380 = por %p378, %p379
      %s382 = sadd.s32 %s381, 1
      %p385 = scmp.eq.s32.totalorder %s28, 1
      %p386 = scmp.ne.s32.totalorder %s381, %s383
      %p387 = scmp.eq.s32.totalorder %s28, 0
      %p388 = por %p386, %p387
      %p389 = scmp.ne.s32.totalorder %s381, %s383
      %p390 = scmp.eq.s32.totalorder %s33, 1
      %p391 = por %p389, %p390
      %p392 = scmp.ne.s32.totalorder %s383, %s384
      %p393 = scmp.eq.s32.totalorder %s33, 0
      %p394 = por %p392, %p393
      %p395 = scmp.ne.s32.totalorder %s383, %s384
      %p396 = scmp.eq.s32.totalorder %s34, 1
      %p397 = por %p395, %p396
      %p399 = scmp.ne.s32.totalorder %s384, %s398
      %p400 = scmp.eq.s32.totalorder %s34, 0
      %p401 = por %p399, %p400
      %s402 = ssub.s32 %s35, %s47
      %p403 = scmp.eq.s32.totalorder %s402, 0
      %s405 = sadd.s32 %s404, 1
      %s406 = scalar_select %p403, %s404, %s405
      %p409 = pneg %p403
      %p410 = scmp.eq.s32.totalorder %s28, 1
      %p411 = por %p409, %p410
      %p412 = scmp.ne.s32.totalorder %s404, %s407
      %p413 = scmp.eq.s32.totalorder %s28, 0
      %p414 = por %p412, %p413
      %p415 = scmp.ne.s32.totalorder %s404, %s407
      %p416 = scmp.eq.s32.totalorder %s33, 1
      %p417 = por %p415, %p416
      %p418 = scmp.ne.s32.totalorder %s407, %s408
      %p419 = scmp.eq.s32.totalorder %s33, 0
      %p420 = por %p418, %p419
      %p421 = scmp.ne.s32.totalorder %s407, %s408
      %p422 = scmp.eq.s32.totalorder %s34, 1
      %p423 = por %p421, %p422
      %p425 = scmp.ne.s32.totalorder %s408, %s424
      %p426 = scmp.eq.s32.totalorder %s34, 0
      %p427 = por %p425, %p426
      %p428 = scmp.le.s32.totalorder 1, %s28
      %p429 = scmp.lt.s32.totalorder %s28, 3
      %p430 = pnand %p428, %p429
      %p431 = pneg %p430
      // Predicated region
      $region9: #{transformer_forward.1} parent=5 // pred_check
        _
      $region10: #{transformer_forward.1} parent=5 // pred_check_branch
        %433 = sbr.rel (%p430) target = $region12
      $region11: #{transformer_forward.1} parent=5 // pred_region
        %s434 = ssub.s32 %s28, 1
        // Predicated region
        $region13: #{transformer_forward.1} parent=11 // pred_check
          %p435 = pneg %p66
        $region14: #{transformer_forward.1} parent=11 // pred_check_branch
          %437 = sbr.rel (%p435) target = $region16
        $region15: #{transformer_forward.1} parent=11 // pred_region
          %s438 = smul.u32 2, %s37
          %p439 = scmp.lt.s32.totalorder %s438, 1
          %s440 = scalar_select %p439, %s438, 1
          %s441 = smul.addr %s440, 8
          %s442 = scalar_lea.vmem %s0, %s441
          %s443 = smul.u32 2, %s37
        $region16: #{transformer_forward.1} parent=11 // pred_fallthru
          _
        // Predicated region
        $region17: #{transformer_forward.1} parent=11 // pred_check
          %p444 = pneg %p373
        $region18: #{transformer_forward.1} parent=11 // pred_check_branch
          %446 = sbr.rel (%p444) target = $region20
        $region19: #{transformer_forward.1} parent=11 // pred_region
          _
        $region20: #{transformer_forward.1} parent=11 // pred_fallthru
          _
        // Predicated region
        $region21: #{transformer_forward.1} parent=11 // pred_check
          %p447 = pneg %p394
        $region22: #{transformer_forward.1} parent=11 // pred_check_branch
          %449 = sbr.rel (%p447) target = $region24
        $region23: #{transformer_forward.1} parent=11 // pred_region
          %s451 = ssub.s32 16, 16
          %452 = vsyncadd [#allocation11], %s451
          %s454 = sshll.u32 [#allocation10], 4
          %s455 = int_to_ptr.vmem [resolvable:$true] %s454
          %457 = dma.hbm_to_vmem [thread:$0]  %s13, 16, %s455, [#allocation11]
        $region24: #{transformer_forward.1} parent=11 // pred_fallthru
          _
      $region12: #{transformer_forward.1} parent=5 // pred_fallthru
        _
      %p458 = scmp.lt.s32.totalorder %s28, 2
      // Predicated region
      $region25: #{transformer_forward.1} parent=5 // pred_check
        %p459 = pneg %p458
      $region26: #{transformer_forward.1} parent=5 // pred_check_branch
        %461 = sbr.rel (%p459) target = $region28
      $region27: #{transformer_forward.1} parent=5 // pred_region
        // Predicated region
        $region29: #{transformer_forward.1} parent=27 // pred_check
          %p462 = pneg %p86
        $region30: #{transformer_forward.1} parent=27 // pred_check_branch
          %464 = sbr.rel (%p462) target = $region32
        $region31: #{transformer_forward.1} parent=27 // pred_region
          %p465 = scmp.lt.s32.totalorder %s36, 1
          %s466 = scalar_select %p465, %s36, 1
          %s467 = scalar_lea.vmem %s1, %s466
        $region32: #{transformer_forward.1} parent=27 // pred_fallthru
          _
        // Predicated region
        $region33: #{transformer_forward.1} parent=27 // pred_check
          %p468 = pneg %p112
        $region34: #{transformer_forward.1} parent=27 // pred_check_branch
          %470 = sbr.rel (%p468) target = $region36
        $region35: #{transformer_forward.1} parent=27 // pred_region
          %s471 = sand.u32 %s102, 1
          %s472 = scalar_lea.sflag [#allocation5], %s471
          %s473 = sand.u32 %s102, 1
          %s474 = scalar_lea.vmem [#allocation4], %s473
          %s476 = ssub.s32 16, 16
          %477 = vsyncadd %s472, %s476
          %s478 = smul.addr %s36, 16
          %s479 = scalar_lea.hbm %s2, %s478
          %s481 = sshll.u32 %s474, 4
          %s482 = int_to_ptr.vmem [resolvable:$true] %s481
          %484 = dma.hbm_to_vmem [thread:$0]  %s479, 16, %s482, %s472
        $region36: #{transformer_forward.1} parent=27 // pred_fallthru
          _
        // Predicated region
        $region37: #{transformer_forward.1} parent=27 // pred_check
          %p485 = pneg %p138
        $region38: #{transformer_forward.1} parent=27 // pred_check_branch
          %487 = sbr.rel (%p485) target = $region40
        $region39: #{transformer_forward.1} parent=27 // pred_region
          %p488 = scmp.lt.s32.totalorder %s36, 1
          %s489 = scalar_select %p488, %s36, 1
          %s490 = smul.addr %s489, 16
          %s491 = smul.addr %s490, 4
          %s492 = scalar_lea.vmem %s3, %s491
        $region40: #{transformer_forward.1} parent=27 // pred_fallthru
          _
        // Predicated region
        $region41: #{transformer_forward.1} parent=27 // pred_check
          %p493 = pneg %p164
        $region42: #{transformer_forward.1} parent=27 // pred_check_branch
          %495 = sbr.rel (%p493) target = $region44
        $region43: #{transformer_forward.1} parent=27 // pred_region
          %s496 = sand.u32 %s28, 1
          %s497 = scalar_lea.sflag [#allocation8], %s496
          %s498 = sand.u32 %s154, 1
          %s499 = smul.addr %s498, 16
          %s500 = scalar_lea.vmem [#allocation7], %s499
          %s502 = ssub.s32 256, 256
          %503 = vsyncadd %s497, %s502
          %s504 = smul.addr %s36, 4
          %s505 = smul.addr %s504, 64
          %s506 = scalar_lea.hbm %s4, %s505
          %s507 = sshll.u32 %s500, 4
          %s508 = int_to_ptr.vmem [resolvable:$true] %s507
          %513 = dma.hbm_to_vmem [thread:$0]  %s506, 256, %s508, %s497, 64, 64, 4
        $region44: #{transformer_forward.1} parent=27 // pred_fallthru
          _
        // Predicated region
        $region45: #{transformer_forward.1} parent=27 // pred_check
          %p514 = pneg %p190
        $region46: #{transformer_forward.1} parent=27 // pred_check_branch
          %516 = sbr.rel (%p514) target = $region48
        $region47: #{transformer_forward.1} parent=27 // pred_region
          %p517 = scmp.lt.s32.totalorder %s36, 1
          %s518 = scalar_select %p517, %s36, 1
          %s519 = scalar_lea.vmem %s5, %s518
        $region48: #{transformer_forward.1} parent=27 // pred_fallthru
          _
        // Predicated region
        $region49: #{transformer_forward.1} parent=27 // pred_check
          %p520 = pneg %p216
        $region50: #{transformer_forward.1} parent=27 // pred_check_branch
          %522 = sbr.rel (%p520) target = $region52
        $region51: #{transformer_forward.1} parent=27 // pred_region
          %p523 = scmp.lt.s32.totalorder %s36, 1
          %s524 = scalar_select %p523, %s36, 1
          %s525 = scalar_lea.vmem %s6, %s524
        $region52: #{transformer_forward.1} parent=27 // pred_fallthru
          _
        // Predicated region
        $region53: #{transformer_forward.1} parent=27 // pred_check
          %p526 = pneg %p242
        $region54: #{transformer_forward.1} parent=27 // pred_check_branch
          %528 = sbr.rel (%p526) target = $region56
        $region55: #{transformer_forward.1} parent=27 // pred_region
          %s529 = sand.u32 %s28, 1
          %s530 = scalar_lea.sflag [#allocation8], %s529
          %s531 = sand.u32 %s232, 1
          %s532 = scalar_lea.vmem [#allocation9], %s531
          %s534 = ssub.s32 16, 16
          %535 = vsyncadd %s530, %s534
          %s536 = smul.addr %s36, 16
          %s537 = scalar_lea.hbm %s7, %s536
          %s539 = sshll.u32 %s532, 4
          %s540 = int_to_ptr.vmem [resolvable:$true] %s539
          %542 = dma.hbm_to_vmem [thread:$0]  %s537, 16, %s540, %s530
        $region56: #{transformer_forward.1} parent=27 // pred_fallthru
          _
        // Predicated region
        $region57: #{transformer_forward.1} parent=27 // pred_check
          %p543 = pneg %p268
        $region58: #{transformer_forward.1} parent=27 // pred_check_branch
          %545 = sbr.rel (%p543) target = $region60
        $region59: #{transformer_forward.1} parent=27 // pred_region
          %p546 = scmp.lt.s32.totalorder %s36, 1
          %s547 = scalar_select %p546, %s36, 1
          %s548 = smul.addr %s547, 16
          %s549 = smul.addr %s548, 4
          %s550 = scalar_lea.vmem %s8, %s549
        $region60: #{transformer_forward.1} parent=27 // pred_fallthru
          _
        // Predicated region
        $region61: #{transformer_forward.1} parent=27 // pred_check
          %p551 = pneg %p294
        $region62: #{transformer_forward.1} parent=27 // pred_check_branch
          %553 = sbr.rel (%p551) target = $region64
        $region63: #{transformer_forward.1} parent=27 // pred_region
          %p554 = scmp.lt.s32.totalorder %s36, 1
          %s555 = scalar_select %p554, %s36, 1
          %s556 = scalar_lea.vmem %s9, %s555
        $region64: #{transformer_forward.1} parent=27 // pred_fallthru
          _
        // Predicated region
        $region65: #{transformer_forward.1} parent=27 // pred_check
          %p557 = pneg %p320
        $region66: #{transformer_forward.1} parent=27 // pred_check_branch
          %559 = sbr.rel (%p557) target = $region68
        $region67: #{transformer_forward.1} parent=27 // pred_region
          %p560 = scmp.lt.s32.totalorder %s36, 1
          %s561 = scalar_select %p560, %s36, 1
          %s562 = smul.addr %s561, 16
          %s563 = smul.addr %s562, 4
          %s564 = scalar_lea.vmem %s10, %s563
        $region68: #{transformer_forward.1} parent=27 // pred_fallthru
          _
        // Predicated region
        $region69: #{transformer_forward.1} parent=27 // pred_check
          %p565 = pneg %p346
        $region70: #{transformer_forward.1} parent=27 // pred_check_branch
          %567 = sbr.rel (%p565) target = $region72
        $region71: #{transformer_forward.1} parent=27 // pred_region
          %p568 = scmp.lt.s32.totalorder %s36, 1
          %s569 = scalar_select %p568, %s36, 1
          %s570 = scalar_lea.vmem %s11, %s569
        $region72: #{transformer_forward.1} parent=27 // pred_fallthru
          _
      $region28: #{transformer_forward.1} parent=5 // pred_fallthru
        _
      %p571 = scmp.le.s32.totalorder 1, %s28
      %p572 = scmp.lt.s32.totalorder %s28, 3
      %p573 = pnand %p571, %p572
      %p574 = pneg %p573
      // Predicated region
      $region73: #{transformer_forward.1} parent=5 // pred_check
        _
      $region74: #{transformer_forward.1} parent=5 // pred_check_branch
        %576 = sbr.rel (%p573) target = $region76
      $region75: #{transformer_forward.1} parent=5 // pred_region
        %s577 = ssub.s32 %s28, 1
        %s578 = sand.u32 %s105, 1
        %s579 = scalar_lea.sflag [#allocation5], %s578
        %s580 = sand.u32 %s105, 1
        %s581 = scalar_lea.vmem [#allocation4], %s580
        // Predicated region
        $region77: #{transformer_forward.1} parent=75 // pred_check
          %p582 = pneg %p118
        $region78: #{transformer_forward.1} parent=75 // pred_check_branch
          %584 = sbr.rel (%p582) target = $region80
        $region79: #{transformer_forward.1} parent=75 // pred_region
          %585 = dma.done %s579, 16
        $region80: #{transformer_forward.1} parent=75 // pred_fallthru
          _
        %s586 = sand.u32 %s33, 1
        %s587 = scalar_lea.sflag [#allocation8], %s586
        %s588 = sand.u32 %s157, 1
        %s589 = smul.addr %s588, 16
        %s590 = scalar_lea.vmem [#allocation7], %s589
        // Predicated region
        $region81: #{transformer_forward.1} parent=75 // pred_check
          %p591 = pneg %p170
        $region82: #{transformer_forward.1} parent=75 // pred_check_branch
          %593 = sbr.rel (%p591) target = $region84
        $region83: #{transformer_forward.1} parent=75 // pred_region
          %594 = dma.done %s587, 256
        $region84: #{transformer_forward.1} parent=75 // pred_fallthru
          _
        %s595 = sand.u32 %s33, 1
        %s596 = scalar_lea.sflag [#allocation8], %s595
        %s597 = sand.u32 %s235, 1
        %s598 = scalar_lea.vmem [#allocation9], %s597
        // Predicated region
        $region85: #{transformer_forward.1} parent=75 // pred_check
          %p599 = pneg %p248
        $region86: #{transformer_forward.1} parent=75 // pred_check_branch
          %601 = sbr.rel (%p599) target = $region88
        $region87: #{transformer_forward.1} parent=75 // pred_region
          %602 = dma.done %s596, 16
        $region88: #{transformer_forward.1} parent=75 // pred_fallthru
          _
        // Predicated region
        $region89: #{transformer_forward.1} parent=75 // pred_check
          %p603 = pneg %p394
        $region90: #{transformer_forward.1} parent=75 // pred_check_branch
          %605 = sbr.rel (%p603) target = $region92
        $region91: #{transformer_forward.1} parent=75 // pred_region
          %606 = dma.done [#allocation11], 16
        $region92: #{transformer_forward.1} parent=75 // pred_fallthru
          _
        %s607 = smul.u32 2, %s37
        %p608 = scmp.lt.s32.totalorder %s607, 1
        %s609 = scalar_select %p608, %s607, 1
        %s610 = smul.addr %s609, 8
        %s611 = scalar_lea.vmem %s0, %s610
        %p612 = pneg %p66
        %p613 = pneg %p63
        %p614 = scmp.lt.s32.totalorder %s38, 1
        %s615 = scalar_select %p614, %s38, 1
        %s616 = scalar_lea.vmem %s1, %s615
        %p617 = pneg %p92
        %p618 = pneg %p89
        %s619 = sand.u32 %s105, 1
        %s620 = scalar_lea.sflag [#allocation5], %s619
        %s621 = sand.u32 %s105, 1
        %s622 = scalar_lea.vmem [#allocation4], %s621
        %p623 = pneg %p118
        %p624 = pneg %p115
        %p625 = scmp.lt.s32.totalorder %s38, 1
        %s626 = scalar_select %p625, %s38, 1
        %s627 = smul.addr %s626, 16
        %s628 = smul.addr %s627, 4
        %s629 = scalar_lea.vmem %s3, %s628
        %p630 = pneg %p144
        %p631 = pneg %p141
        %s632 = sand.u32 %s33, 1
        %s633 = scalar_lea.sflag [#allocation8], %s632
        %s634 = sand.u32 %s157, 1
        %s635 = smul.addr %s634, 16
        %s636 = scalar_lea.vmem [#allocation7], %s635
        %p637 = pneg %p170
        %p638 = pneg %p167
        %p639 = scmp.lt.s32.totalorder %s38, 1
        %s640 = scalar_select %p639, %s38, 1
        %s641 = scalar_lea.vmem %s5, %s640
        %p642 = pneg %p196
        %p643 = pneg %p193
        %p644 = scmp.lt.s32.totalorder %s38, 1
        %s645 = scalar_select %p644, %s38, 1
        %s646 = scalar_lea.vmem %s6, %s645
        %p647 = pneg %p222
        %p648 = pneg %p219
        %s649 = sand.u32 %s33, 1
        %s650 = scalar_lea.sflag [#allocation8], %s649
        %s651 = sand.u32 %s235, 1
        %s652 = scalar_lea.vmem [#allocation9], %s651
        %p653 = pneg %p248
        %p654 = pneg %p245
        %p655 = scmp.lt.s32.totalorder %s38, 1
        %s656 = scalar_select %p655, %s38, 1
        %s657 = smul.addr %s656, 16
        %s658 = smul.addr %s657, 4
        %s659 = scalar_lea.vmem %s8, %s658
        %p660 = pneg %p274
        %p661 = pneg %p271
        %p662 = scmp.lt.s32.totalorder %s38, 1
        %s663 = scalar_select %p662, %s38, 1
        %s664 = scalar_lea.vmem %s9, %s663
        %p665 = pneg %p300
        %p666 = pneg %p297
        %p667 = scmp.lt.s32.totalorder %s38, 1
        %s668 = scalar_select %p667, %s38, 1
        %s669 = smul.addr %s668, 16
        %s670 = smul.addr %s669, 4
        %s671 = scalar_lea.vmem %s10, %s670
        %p672 = pneg %p326
        %p673 = pneg %p323
        %p674 = scmp.lt.s32.totalorder %s38, 1
        %s675 = scalar_select %p674, %s38, 1
        %s676 = scalar_lea.vmem %s11, %s675
        %p677 = pneg %p352
        %p678 = pneg %p349
        %p679 = pneg %p373
        %p680 = pneg %p370
        %p681 = pneg %p394
        %p682 = pneg %p391
        %p683 = pneg %p420
        %p684 = pneg %p417
        %s685 = smul.u32 2, %s37
        %p686 = scmp.lt.s32.totalorder %s685, 1
        %s687 = scalar_select %p686, %s685, 1
        %s688 = smul.addr %s687, 8
        %s689 = scalar_lea.vmem %s0, %s688
        %s690 = smul.u32 2, %s37
        %p691 = scmp.lt.s32.totalorder %s38, 1
        %s692 = scalar_select %p691, %s38, 1
        %s693 = scalar_lea.vmem %s1, %s692
        %p694 = scmp.lt.s32.totalorder %s38, 1
        %s695 = scalar_select %p694, %s38, 1
        %s696 = smul.addr %s695, 16
        %s697 = smul.addr %s696, 4
        %s698 = scalar_lea.vmem %s3, %s697
        %p699 = scmp.lt.s32.totalorder %s38, 1
        %s700 = scalar_select %p699, %s38, 1
        %s701 = scalar_lea.vmem %s5, %s700
        %p702 = scmp.lt.s32.totalorder %s38, 1
        %s703 = scalar_select %p702, %s38, 1
        %s704 = scalar_lea.vmem %s6, %s703
        %p705 = scmp.lt.s32.totalorder %s38, 1
        %s706 = scalar_select %p705, %s38, 1
        %s707 = smul.addr %s706, 16
        %s708 = smul.addr %s707, 4
        %s709 = scalar_lea.vmem %s8, %s708
        %p710 = scmp.lt.s32.totalorder %s38, 1
        %s711 = scalar_select %p710, %s38, 1
        %s712 = scalar_lea.vmem %s9, %s711
        %p713 = scmp.lt.s32.totalorder %s38, 1
        %s714 = scalar_select %p713, %s38, 1
        %s715 = smul.addr %s714, 16
        %s716 = smul.addr %s715, 4
        %s717 = scalar_lea.vmem %s10, %s716
        %p718 = scmp.lt.s32.totalorder %s38, 1
        %s719 = scalar_select %p718, %s38, 1
        %s720 = scalar_lea.vmem %s11, %s719
        %s721 = smul.u32 2, %s37
        %p723 = scmp.eq.s32.totalorder %s38, 0
        // Predicated region
        $region93: #{transformer_forward.1} parent=75 // pred_check
          %p724 = pneg %p723
        $region94: #{transformer_forward.1} parent=75 // pred_check_branch
          %726 = sbr.rel (%p724) target = $region96
        $region95: #{transformer_forward.1} parent=75 // pred_region
          %v727 = vld [vmem:[%s689] sm:$0xff]
          %728 = vst [vmem:[#allocation2] sm:$0xff] %v727
          %s729 = scalar_lea.vmem %s689, 8
          %v730 = vld [vmem:[%s729] sm:$0xff]
          %731 = vst [vmem:[#allocation2 + $0x8] sm:$0xff] %v730
        $region96: #{transformer_forward.1} parent=75 // pred_fallthru
          _
        %v732 = vld [vmem:[#allocation2] sm:$0xff]
        %v733 = vld [vmem:[#allocation2 + $0x8] sm:$0xff]
        %v734 = vld [vmem:[%s693] sm:$0x1]
        %v735 = vld [vmem:[%s581] sm:$0x1]
        %736 = vadd.xlane.f32.xlu0 %v732
        %v737 = vpop.xlane.xlu0 %736
        %738 = vadd.xlane.f32.xlu0 %v733
        %v739 = vpop.xlane.xlu0 %738
        %v740 = vmul.f32 %v737, 0.03125
        %v741 = vmul.f32 %v739, 0.03125
        %v742 = vmul.f32 %v732, %v732
        %v743 = vmul.f32 %v733, %v733
        %744 = vadd.xlane.f32.xlu0 %v742
        %v745 = vpop.xlane.xlu0 %744
        %746 = vadd.xlane.f32.xlu0 %v743
        %v747 = vpop.xlane.xlu0 %746
        %v748 = vmul.f32 %v745, 0.03125
        %v749 = vmul.f32 %v747, 0.03125
        %v750 = vmul.f32 %v740, %v740
        %v751 = vmul.f32 %v741, %v741
        %v752 = vsub.f32 %v748, %v750
        %v753 = vsub.f32 %v749, %v751
        %v754 = vsub.f32 %v732, %v740
        %v755 = vsub.f32 %v733, %v741
        %v756 = vadd.f32 %v752, 1e-05
        %v757 = vadd.f32 %v753, 1e-05
        %v758 = vrsqrt.pop %v756
        %v759 = vrsqrt.pop %v757
        %v760 = vmul.f32 %v754, %v758
        %v761 = vmul.f32 %v755, %v759
        %v763 = vlaneseq
        %v764 = vshrl.u32 %v763, 7
        %v765 = vsub.s32 0, %v764
        %v766 = vrot.slane %v734, %v765
        %v768 = vmul.f32 %v760, %v766
        %v769 = vmul.f32 %v761, %v766
        %v771 = vlaneseq
        %v772 = vshrl.u32 %v771, 7
        %v773 = vsub.s32 0, %v772
        %v774 = vrot.slane %v735, %v773
        %v776 = vadd.f32 %v768, %v774
        %v777 = vadd.f32 %v769, %v774
        %v778 = vpack.c.bf16 %v777, %v776
        %v779 = vld [vmem:[%s698] sm:$0xf]
        %v780 = vld [vmem:[%s698 + $0x4] sm:$0xf]
        %v781 = vld [vmem:[%s698 + $0x8] sm:$0xf]
        %v782 = vld [vmem:[%s698 + $0xc] sm:$0xf]
        %v783 = vld [vmem:[%s698 + $0x10] sm:$0xf]
        %v784 = vld [vmem:[%s698 + $0x14] sm:$0xf]
        %v785 = vld [vmem:[%s698 + $0x18] sm:$0xf]
        %v786 = vld [vmem:[%s698 + $0x1c] sm:$0xf]
        %v787 = vld [vmem:[%s698 + $0x20] sm:$0xf]
        %v788 = vld [vmem:[%s698 + $0x24] sm:$0xf]
        %v789 = vld [vmem:[%s698 + $0x28] sm:$0xf]
        %v790 = vld [vmem:[%s698 + $0x2c] sm:$0xf]
        %v791 = vld [vmem:[%s698 + $0x30] sm:$0xf]
        %v792 = vld [vmem:[%s698 + $0x34] sm:$0xf]
        %v793 = vld [vmem:[%s698 + $0x38] sm:$0xf]
        %v794 = vld [vmem:[%s698 + $0x3c] sm:$0xf]
        %v811 = vunpack.c.l.b16 %v779
        %v812 = vunpack.c.l.b16 %v780
        %v813 = vunpack.c.l.b16 %v781
        %v814 = vunpack.c.l.b16 %v782
        %v815 = vunpack.c.l.b16 %v783
        %v816 = vunpack.c.l.b16 %v784
        %v817 = vunpack.c.l.b16 %v785
        %v818 = vunpack.c.l.b16 %v786
        %v819 = vunpack.c.l.b16 %v787
        %v820 = vunpack.c.l.b16 %v788
        %v821 = vunpack.c.l.b16 %v789
        %v822 = vunpack.c.l.b16 %v790
        %v823 = vunpack.c.l.b16 %v791
        %v824 = vunpack.c.l.b16 %v792
        %v825 = vunpack.c.l.b16 %v793
        %v826 = vunpack.c.l.b16 %v794
        %v827 = vpack.c.b16 %v812, %v811
        %v828 = vpack.c.b16 %v814, %v813
        %v829 = vpack.c.b16 %v816, %v815
        %v830 = vpack.c.b16 %v818, %v817
        %v831 = vpack.c.b16 %v820, %v819
        %v832 = vpack.c.b16 %v822, %v821
        %v833 = vpack.c.b16 %v824, %v823
        %v834 = vpack.c.b16 %v826, %v825
        %843 = vmatprep.subr.bf16.mxu0 0
        %844 = vmatpush1.bf16.msra.mxu0 %v834
        %845 = vmatprep.subr.bf16.mxu0 0
        %846 = vmatpush1.bf16.msra.mxu0 %v833
        %847 = vmatprep.subr.bf16.mxu0 0
        %848 = vmatpush1.bf16.msra.mxu0 %v832
        %849 = vmatprep.subr.bf16.mxu0 0
        %850 = vmatpush1.bf16.msra.mxu0 %v831
        %851 = vmatprep.subr.bf16.mxu0 0
        %852 = vmatpush1.bf16.msra.mxu0 %v830
        %853 = vmatprep.subr.bf16.mxu0 0
        %854 = vmatpush1.bf16.msra.mxu0 %v829
        %855 = vmatprep.subr.bf16.mxu0 0
        %856 = vmatpush1.bf16.msra.mxu0 %v828
        %857 = vmatprep.subr.bf16.mxu0 0
        %858 = vmatpush1.bf16.msra.mxu0 %v827
        %859 = vmatprep.subr.bf16.mxu0 0
        %860 = vmatpush2.bf16.msra.mxu0 0
        %861 = vmatprep.subr.bf16.mxu0 0
        %862 = vmatpush2.bf16.msra.mxu0 0
        %863 = vmatprep.subr.bf16.mxu0 0
        %864 = vmatpush2.bf16.msra.mxu0 0
        %865 = vmatprep.subr.bf16.mxu0 0
        %866 = vmatpush2.bf16.msra.mxu0 0
        %867 = vmatprep.subr.bf16.mxu0 0
        %868 = vmatpush2.bf16.msra.mxu0 0
        %869 = vmatprep.subr.bf16.mxu0 0
        %870 = vmatpush2.bf16.msra.mxu0 0
        %871 = vmatprep.subr.bf16.mxu0 0
        %872 = vmatpush2.bf16.msra.mxu0 0
        %873 = vmatprep.subr.bf16.mxu0 0
        %874 = vmatpush2.bf16.msra.mxu0 0
        %875 = vmatprep.mubr.bf16.mxu0 0
        %876 = vmatmul.mubr.bf16.gmra.mxu0 %v778
        %v877 = vpop.f32.mrf.mxu0
        %v878 = vadd.f32 0.0, %v877
        %v879 = vpop.f32.mrf.mxu0
        %v880 = vpop.f32.mrf.mxu0
        %v881 = vadd.f32 0.0, %v880
        %v882 = vpop.f32.mrf.mxu0
        %883 = vdwg.mxu0
        %v884 = vpack.c.bf16 %v878, %v878
        %886 = vrot.lane.b32.xlu0 %v884, 96
        %v887 = vpop.permute.xlu0 %886
        %vm888 = vcmask 64512
        %v890 = vsel %vm888, %v884, 0
        %v893 = vsel %vm888, %v887, 0
        %895 = vmatprep.subr.bf16.mxu0 0
        %896 = vmatpush1.bf16.xpose.msra.mxu0 0
        %897 = vmatprep.subr.bf16.mxu0 0
        %898 = vmatpush1.bf16.xpose.msra.mxu0 0
        %899 = vmatprep.subr.bf16.mxu0 0
        %900 = vmatpush1.bf16.xpose.msra.mxu0 0
        %901 = vmatprep.subr.bf16.mxu0 0
        %902 = vmatpush1.bf16.xpose.msra.mxu0 0
        %903 = vmatprep.subr.bf16.mxu0 0
        %904 = vmatpush1.bf16.xpose.msra.mxu0 0
        %905 = vmatprep.subr.bf16.mxu0 0
        %906 = vmatpush1.bf16.xpose.msra.mxu0 0
        %907 = vmatprep.subr.bf16.mxu0 0
        %908 = vmatpush1.bf16.xpose.msra.mxu0 0
        %909 = vmatprep.subr.bf16.mxu0 0
        %910 = vmatpush1.bf16.xpose.msra.mxu0 %v893
        %911 = vmatprep.subr.bf16.mxu0 0
        %912 = vmatpush2.bf16.xpose.msra.mxu0 0
        %913 = vmatprep.subr.bf16.mxu0 0
        %914 = vmatpush2.bf16.xpose.msra.mxu0 0
        %915 = vmatprep.subr.bf16.mxu0 0
        %916 = vmatpush2.bf16.xpose.msra.mxu0 0
        %917 = vmatprep.subr.bf16.mxu0 0
        %918 = vmatpush2.bf16.xpose.msra.mxu0 0
        %919 = vmatprep.subr.bf16.mxu0 0
        %920 = vmatpush2.bf16.xpose.msra.mxu0 0
        %921 = vmatprep.subr.bf16.mxu0 0
        %922 = vmatpush2.bf16.xpose.msra.mxu0 0
        %923 = vmatprep.subr.bf16.mxu0 0
        %924 = vmatpush2.bf16.xpose.msra.mxu0 0
        %925 = vmatprep.subr.bf16.mxu0 0
        %926 = vmatpush2.bf16.xpose.msra.mxu0 0
        %927 = vmatprep.mubr.bf16.mxu0 0
        %928 = vmatmul.mubr.bf16.gmra.mxu0 %v890
        %v929 = vpop.f32.mrf.mxu0
        %v930 = vadd.f32 0.0, %v929
        %v931 = vpop.f32.mrf.mxu0
        %v932 = vpop.f32.mrf.mxu0
        %v933 = vpop.f32.mrf.mxu0
        %934 = vdwg.mxu0
        %v935 = vsel %vm888, %v930, -inf
        %936 = vmax.xlane.f32.xlu0 %v935
        %v937 = vpop.xlane.xlu0 %936
        %v938 = vsub.f32 %v930, %v937
        %v939 = vmul.f32 %v938, 1.442695
        %v940 = vpow.pop %v939
        %v941 = vsel %vm888, %v940, 0.0
        %942 = vadd.xlane.f32.xlu0 %v941
        %v943 = vpop.xlane.xlu0 %942
        %v944 = vpack.c.bf16 %v940, %v940
        %945 = vrot.lane.b32.xlu0 %v884, 64
        %v946 = vpop.permute.xlu0 %945
        %v948 = vsel %vm888, %v944, 0
        %vm950 = vcmask 1043456
        %v952 = vsel %vm950, %v946, 0
        %954 = vmatprep.subr.bf16.mxu0 0
        %955 = vmatpush1.bf16.msra.mxu0 0
        %956 = vmatprep.subr.bf16.mxu0 0
        %957 = vmatpush1.bf16.msra.mxu0 0
        %958 = vmatprep.subr.bf16.mxu0 0
        %959 = vmatpush1.bf16.msra.mxu0 0
        %960 = vmatprep.subr.bf16.mxu0 0
        %961 = vmatpush1.bf16.msra.mxu0 0
        %962 = vmatprep.subr.bf16.mxu0 0
        %963 = vmatpush1.bf16.msra.mxu0 0
        %964 = vmatprep.subr.bf16.mxu0 0
        %965 = vmatpush1.bf16.msra.mxu0 0
        %966 = vmatprep.subr.bf16.mxu0 0
        %967 = vmatpush1.bf16.msra.mxu0 0
        %968 = vmatprep.subr.bf16.mxu0 0
        %969 = vmatpush1.bf16.msra.mxu0 %v952
        %970 = vmatprep.subr.bf16.mxu0 0
        %971 = vmatpush2.bf16.msra.mxu0 0
        %972 = vmatprep.subr.bf16.mxu0 0
        %973 = vmatpush2.bf16.msra.mxu0 0
        %974 = vmatprep.subr.bf16.mxu0 0
        %975 = vmatpush2.bf16.msra.mxu0 0
        %976 = vmatprep.subr.bf16.mxu0 0
        %977 = vmatpush2.bf16.msra.mxu0 0
        %978 = vmatprep.subr.bf16.mxu0 0
        %979 = vmatpush2.bf16.msra.mxu0 0
        %980 = vmatprep.subr.bf16.mxu0 0
        %981 = vmatpush2.bf16.msra.mxu0 0
        %982 = vmatprep.subr.bf16.mxu0 0
        %983 = vmatpush2.bf16.msra.mxu0 0
        %984 = vmatprep.subr.bf16.mxu0 0
        %985 = vmatpush2.bf16.msra.mxu0 0
        %986 = vmatprep.mubr.bf16.mxu0 0
        %987 = vmatmul.mubr.bf16.gmra.mxu0 %v948
        %v988 = vpop.f32.mrf.mxu0
        %v989 = vadd.f32 0.0, %v988
        %v990 = vpop.f32.mrf.mxu0
        %v991 = vpop.f32.mrf.mxu0
        %v992 = vpop.f32.mrf.mxu0
        %993 = vdwg.mxu0
        %v994 = vrcp.pop %v943
        %v995 = vmul.f32 %v989, %v994
        %996 = vst.msk [vmem:[#allocation3] sm:$0xff] %vm888, %v995
        %997 = vrot.lane.b32.xlu0 %v884, 120
        %v998 = vpop.permute.xlu0 %997
        %999 = vrot.lane.b32.xlu0 %v884, 88
        %v1000 = vpop.permute.xlu0 %999
        %v1002 = vsel %vm888, %v998, 0
        %v1005 = vsel %vm888, %v1000, 0
        %1007 = vmatprep.subr.bf16.mxu0 0
        %1008 = vmatpush1.bf16.xpose.msra.mxu0 0
        %1009 = vmatprep.subr.bf16.mxu0 0
        %1010 = vmatpush1.bf16.xpose.msra.mxu0 0
        %1011 = vmatprep.subr.bf16.mxu0 0
        %1012 = vmatpush1.bf16.xpose.msra.mxu0 0
        %1013 = vmatprep.subr.bf16.mxu0 0
        %1014 = vmatpush1.bf16.xpose.msra.mxu0 0
        %1015 = vmatprep.subr.bf16.mxu0 0
        %1016 = vmatpush1.bf16.xpose.msra.mxu0 0
        %1017 = vmatprep.subr.bf16.mxu0 0
        %1018 = vmatpush1.bf16.xpose.msra.mxu0 0
        %1019 = vmatprep.subr.bf16.mxu0 0
        %1020 = vmatpush1.bf16.xpose.msra.mxu0 0
        %1021 = vmatprep.subr.bf16.mxu0 0
        %1022 = vmatpush1.bf16.xpose.msra.mxu0 %v1005
        %1023 = vmatprep.subr.bf16.mxu0 0
        %1024 = vmatpush2.bf16.xpose.msra.mxu0 0
        %1025 = vmatprep.subr.bf16.mxu0 0
        %1026 = vmatpush2.bf16.xpose.msra.mxu0 0
        %1027 = vmatprep.subr.bf16.mxu0 0
        %1028 = vmatpush2.bf16.xpose.msra.mxu0 0
        %1029 = vmatprep.subr.bf16.mxu0 0
        %1030 = vmatpush2.bf16.xpose.msra.mxu0 0
        %1031 = vmatprep.subr.bf16.mxu0 0
        %1032 = vmatpush2.bf16.xpose.msra.mxu0 0
        %1033 = vmatprep.subr.bf16.mxu0 0
        %1034 = vmatpush2.bf16.xpose.msra.mxu0 0
        %1035 = vmatprep.subr.bf16.mxu0 0
        %1036 = vmatpush2.bf16.xpose.msra.mxu0 0
        %1037 = vmatprep.subr.bf16.mxu0 0
        %1038 = vmatpush2.bf16.xpose.msra.mxu0 0
        %1039 = vmatprep.mubr.bf16.mxu0 0
        %1040 = vmatmul.mubr.bf16.gmra.mxu0 %v1002
        %v1041 = vpop.f32.mrf.mxu0
        %v1042 = vadd.f32 0.0, %v1041
        %v1043 = vpop.f32.mrf.mxu0
        %v1044 = vpop.f32.mrf.mxu0
        %v1045 = vpop.f32.mrf.mxu0
        %1046 = vdwg.mxu0
        %v1047 = vsel %vm888, %v1042, -inf
        %1048 = vmax.xlane.f32.xlu0 %v1047
        %v1049 = vpop.xlane.xlu0 %1048
        %v1050 = vsub.f32 %v1042, %v1049
        %v1051 = vmul.f32 %v1050, 1.442695
        %v1052 = vpow.pop %v1051
        %v1053 = vsel %vm888, %v1052, 0.0
        %1054 = vadd.xlane.f32.xlu0 %v1053
        %v1055 = vpop.xlane.xlu0 %1054
        %v1056 = vpack.c.bf16 %v1052, %v1052
        %1057 = vrot.lane.b32.xlu0 %v884, 56
        %v1058 = vpop.permute.xlu0 %1057
        %v1060 = vsel %vm888, %v1056, 0
        %v1063 = vsel %vm950, %v1058, 0
        %1065 = vmatprep.subr.bf16.mxu0 0
        %1066 = vmatpush1.bf16.msra.mxu0 0
        %1067 = vmatprep.subr.bf16.mxu0 0
        %1068 = vmatpush1.bf16.msra.mxu0 0
        %1069 = vmatprep.subr.bf16.mxu0 0
        %1070 = vmatpush1.bf16.msra.mxu0 0
        %1071 = vmatprep.subr.bf16.mxu0 0
        %1072 = vmatpush1.bf16.msra.mxu0 0
        %1073 = vmatprep.subr.bf16.mxu0 0
        %1074 = vmatpush1.bf16.msra.mxu0 0
        %1075 = vmatprep.subr.bf16.mxu0 0
        %1076 = vmatpush1.bf16.msra.mxu0 0
        %1077 = vmatprep.subr.bf16.mxu0 0
        %1078 = vmatpush1.bf16.msra.mxu0 0
        %1079 = vmatprep.subr.bf16.mxu0 0
        %1080 = vmatpush1.bf16.msra.mxu0 %v1063
        %1081 = vmatprep.subr.bf16.mxu0 0
        %1082 = vmatpush2.bf16.msra.mxu0 0
        %1083 = vmatprep.subr.bf16.mxu0 0
        %1084 = vmatpush2.bf16.msra.mxu0 0
        %1085 = vmatprep.subr.bf16.mxu0 0
        %1086 = vmatpush2.bf16.msra.mxu0 0
        %1087 = vmatprep.subr.bf16.mxu0 0
        %1088 = vmatpush2.bf16.msra.mxu0 0
        %1089 = vmatprep.subr.bf16.mxu0 0
        %1090 = vmatpush2.bf16.msra.mxu0 0
        %1091 = vmatprep.subr.bf16.mxu0 0
        %1092 = vmatpush2.bf16.msra.mxu0 0
        %1093 = vmatprep.subr.bf16.mxu0 0
        %1094 = vmatpush2.bf16.msra.mxu0 0
        %1095 = vmatprep.subr.bf16.mxu0 0
        %1096 = vmatpush2.bf16.msra.mxu0 0
        %1097 = vmatprep.mubr.bf16.mxu0 0
        %1098 = vmatmul.mubr.bf16.gmra.mxu0 %v1060
        %v1099 = vpop.f32.mrf.mxu0
        %v1100 = vadd.f32 0.0, %v1099
        %v1101 = vpop.f32.mrf.mxu0
        %v1102 = vpop.f32.mrf.mxu0
        %v1103 = vpop.f32.mrf.mxu0
        %1104 = vdwg.mxu0
        %v1105 = vrcp.pop %v1055
        %v1106 = vmul.f32 %v1100, %v1105
        %1108 = vrot.lane.b32.xlu0 %v1106, 8
        %v1109 = vpop.permute.xlu0 %1108
        %vm1111 = vcmask 130112
        %1112 = vst.msk [vmem:[#allocation3] sm:$0xff] %vm1111, %v1109
        %1113 = vrot.lane.b32.xlu0 %v884, 112
        %v1114 = vpop.permute.xlu0 %1113
        %1115 = vrot.lane.b32.xlu0 %v884, 80
        %v1116 = vpop.permute.xlu0 %1115
        %v1118 = vsel %vm888, %v1114, 0
        %v1121 = vsel %vm888, %v1116, 0
        %1123 = vmatprep.subr.bf16.mxu0 0
        %1124 = vmatpush1.bf16.xpose.msra.mxu0 0
        %1125 = vmatprep.subr.bf16.mxu0 0
        %1126 = vmatpush1.bf16.xpose.msra.mxu0 0
        %1127 = vmatprep.subr.bf16.mxu0 0
        %1128 = vmatpush1.bf16.xpose.msra.mxu0 0
        %1129 = vmatprep.subr.bf16.mxu0 0
        %1130 = vmatpush1.bf16.xpose.msra.mxu0 0
        %1131 = vmatprep.subr.bf16.mxu0 0
        %1132 = vmatpush1.bf16.xpose.msra.mxu0 0
        %1133 = vmatprep.subr.bf16.mxu0 0
        %1134 = vmatpush1.bf16.xpose.msra.mxu0 0
        %1135 = vmatprep.subr.bf16.mxu0 0
        %1136 = vmatpush1.bf16.xpose.msra.mxu0 0
        %1137 = vmatprep.subr.bf16.mxu0 0
        %1138 = vmatpush1.bf16.xpose.msra.mxu0 %v1121
        %1139 = vmatprep.subr.bf16.mxu0 0
        %1140 = vmatpush2.bf16.xpose.msra.mxu0 0
        %1141 = vmatprep.subr.bf16.mxu0 0
        %1142 = vmatpush2.bf16.xpose.msra.mxu0 0
        %1143 = vmatprep.subr.bf16.mxu0 0
        %1144 = vmatpush2.bf16.xpose.msra.mxu0 0
        %1145 = vmatprep.subr.bf16.mxu0 0
        %1146 = vmatpush2.bf16.xpose.msra.mxu0 0
        %1147 = vmatprep.subr.bf16.mxu0 0
        %1148 = vmatpush2.bf16.xpose.msra.mxu0 0
        %1149 = vmatprep.subr.bf16.mxu0 0
        %1150 = vmatpush2.bf16.xpose.msra.mxu0 0
        %1151 = vmatprep.subr.bf16.mxu0 0
        %1152 = vmatpush2.bf16.xpose.msra.mxu0 0
        %1153 = vmatprep.subr.bf16.mxu0 0
        %1154 = vmatpush2.bf16.xpose.msra.mxu0 0
        %1155 = vmatprep.mubr.bf16.mxu0 0
        %1156 = vmatmul.mubr.bf16.gmra.mxu0 %v1118
        %v1157 = vpop.f32.mrf.mxu0
        %v1158 = vadd.f32 0.0, %v1157
        %v1159 = vpop.f32.mrf.mxu0
        %v1160 = vpop.f32.mrf.mxu0
        %v1161 = vpop.f32.mrf.mxu0
        %1162 = vdwg.mxu0
        %v1163 = vsel %vm888, %v1158, -inf
        %1164 = vmax.xlane.f32.xlu0 %v1163
        %v1165 = vpop.xlane.xlu0 %1164
        %v1166 = vsub.f32 %v1158, %v1165
        %v1167 = vmul.f32 %v1166, 1.442695
        %v1168 = vpow.pop %v1167
        %v1169 = vsel %vm888, %v1168, 0.0
        %1170 = vadd.xlane.f32.xlu0 %v1169
        %v1171 = vpop.xlane.xlu0 %1170
        %v1172 = vpack.c.bf16 %v1168, %v1168
        %1173 = vrot.lane.b32.xlu0 %v884, 48
        %v1174 = vpop.permute.xlu0 %1173
        %v1176 = vsel %vm888, %v1172, 0
        %v1179 = vsel %vm950, %v1174, 0
        %1181 = vmatprep.subr.bf16.mxu0 0
        %1182 = vmatpush1.bf16.msra.mxu0 0
        %1183 = vmatprep.subr.bf16.mxu0 0
        %1184 = vmatpush1.bf16.msra.mxu0 0
        %1185 = vmatprep.subr.bf16.mxu0 0
        %1186 = vmatpush1.bf16.msra.mxu0 0
        %1187 = vmatprep.subr.bf16.mxu0 0
        %1188 = vmatpush1.bf16.msra.mxu0 0
        %1189 = vmatprep.subr.bf16.mxu0 0
        %1190 = vmatpush1.bf16.msra.mxu0 0
        %1191 = vmatprep.subr.bf16.mxu0 0
        %1192 = vmatpush1.bf16.msra.mxu0 0
        %1193 = vmatprep.subr.bf16.mxu0 0
        %1194 = vmatpush1.bf16.msra.mxu0 0
        %1195 = vmatprep.subr.bf16.mxu0 0
        %1196 = vmatpush1.bf16.msra.mxu0 %v1179
        %1197 = vmatprep.subr.bf16.mxu0 0
        %1198 = vmatpush2.bf16.msra.mxu0 0
        %1199 = vmatprep.subr.bf16.mxu0 0
        %1200 = vmatpush2.bf16.msra.mxu0 0
        %1201 = vmatprep.subr.bf16.mxu0 0
        %1202 = vmatpush2.bf16.msra.mxu0 0
        %1203 = vmatprep.subr.bf16.mxu0 0
        %1204 = vmatpush2.bf16.msra.mxu0 0
        %1205 = vmatprep.subr.bf16.mxu0 0
        %1206 = vmatpush2.bf16.msra.mxu0 0
        %1207 = vmatprep.subr.bf16.mxu0 0
        %1208 = vmatpush2.bf16.msra.mxu0 0
        %1209 = vmatprep.subr.bf16.mxu0 0
        %1210 = vmatpush2.bf16.msra.mxu0 0
        %1211 = vmatprep.subr.bf16.mxu0 0
        %1212 = vmatpush2.bf16.msra.mxu0 0
        %1213 = vmatprep.mubr.bf16.mxu0 0
        %1214 = vmatmul.mubr.bf16.gmra.mxu0 %v1176
        %v1215 = vpop.f32.mrf.mxu0
        %v1216 = vadd.f32 0.0, %v1215
        %v1217 = vpop.f32.mrf.mxu0
        %v1218 = vpop.f32.mrf.mxu0
        %v1219 = vpop.f32.mrf.mxu0
        %1220 = vdwg.mxu0
        %v1221 = vrcp.pop %v1171
        %v1222 = vmul.f32 %v1216, %v1221
        %1224 = vrot.lane.b32.xlu0 %v1222, 16
        %v1225 = vpop.permute.xlu0 %1224
        %vm1227 = vcmask 195712
        %1228 = vst.msk [vmem:[#allocation3] sm:$0xff] %vm1227, %v1225
        %1229 = vrot.lane.b32.xlu0 %v884, 104
        %v1230 = vpop.permute.xlu0 %1229
        %1231 = vrot.lane.b32.xlu0 %v884, 72
        %v1232 = vpop.permute.xlu0 %1231
        %v1234 = vsel %vm888, %v1230, 0
        %v1237 = vsel %vm888, %v1232, 0
        %1239 = vmatprep.subr.bf16.mxu0 0
        %1240 = vmatpush1.bf16.xpose.msra.mxu0 0
        %1241 = vmatprep.subr.bf16.mxu0 0
        %1242 = vmatpush1.bf16.xpose.msra.mxu0 0
        %1243 = vmatprep.subr.bf16.mxu0 0
        %1244 = vmatpush1.bf16.xpose.msra.mxu0 0
        %1245 = vmatprep.subr.bf16.mxu0 0
        %1246 = vmatpush1.bf16.xpose.msra.mxu0 0
        %1247 = vmatprep.subr.bf16.mxu0 0
        %1248 = vmatpush1.bf16.xpose.msra.mxu0 0
        %1249 = vmatprep.subr.bf16.mxu0 0
        %1250 = vmatpush1.bf16.xpose.msra.mxu0 0
        %1251 = vmatprep.subr.bf16.mxu0 0
        %1252 = vmatpush1.bf16.xpose.msra.mxu0 0
        %1253 = vmatprep.subr.bf16.mxu0 0
        %1254 = vmatpush1.bf16.xpose.msra.mxu0 %v1237
        %1255 = vmatprep.subr.bf16.mxu0 0
        %1256 = vmatpush2.bf16.xpose.msra.mxu0 0
        %1257 = vmatprep.subr.bf16.mxu0 0
        %1258 = vmatpush2.bf16.xpose.msra.mxu0 0
        %1259 = vmatprep.subr.bf16.mxu0 0
        %1260 = vmatpush2.bf16.xpose.msra.mxu0 0
        %1261 = vmatprep.subr.bf16.mxu0 0
        %1262 = vmatpush2.bf16.xpose.msra.mxu0 0
        %1263 = vmatprep.subr.bf16.mxu0 0
        %1264 = vmatpush2.bf16.xpose.msra.mxu0 0
        %1265 = vmatprep.subr.bf16.mxu0 0
        %1266 = vmatpush2.bf16.xpose.msra.mxu0 0
        %1267 = vmatprep.subr.bf16.mxu0 0
        %1268 = vmatpush2.bf16.xpose.msra.mxu0 0
        %1269 = vmatprep.subr.bf16.mxu0 0
        %1270 = vmatpush2.bf16.xpose.msra.mxu0 0
        %1271 = vmatprep.mubr.bf16.mxu0 0
        %1272 = vmatmul.mubr.bf16.gmra.mxu0 %v1234
        %v1273 = vpop.f32.mrf.mxu0
        %v1274 = vadd.f32 0.0, %v1273
        %v1275 = vpop.f32.mrf.mxu0
        %v1276 = vpop.f32.mrf.mxu0
        %v1277 = vpop.f32.mrf.mxu0
        %1278 = vdwg.mxu0
        %v1279 = vsel %vm888, %v1274, -inf
        %1280 = vmax.xlane.f32.xlu0 %v1279
        %v1281 = vpop.xlane.xlu0 %1280
        %v1282 = vsub.f32 %v1274, %v1281
        %v1283 = vmul.f32 %v1282, 1.442695
        %v1284 = vpow.pop %v1283
        %v1285 = vsel %vm888, %v1284, 0.0
        %1286 = vadd.xlane.f32.xlu0 %v1285
        %v1287 = vpop.xlane.xlu0 %1286
        %v1288 = vpack.c.bf16 %v1284, %v1284
        %1289 = vrot.lane.b32.xlu0 %v884, 40
        %v1290 = vpop.permute.xlu0 %1289
        %v1292 = vsel %vm888, %v1288, 0
        %v1295 = vsel %vm950, %v1290, 0
        %1297 = vmatprep.subr.bf16.mxu0 0
        %1298 = vmatpush1.bf16.msra.mxu0 0
        %1299 = vmatprep.subr.bf16.mxu0 0
        %1300 = vmatpush1.bf16.msra.mxu0 0
        %1301 = vmatprep.subr.bf16.mxu0 0
        %1302 = vmatpush1.bf16.msra.mxu0 0
        %1303 = vmatprep.subr.bf16.mxu0 0
        %1304 = vmatpush1.bf16.msra.mxu0 0
        %1305 = vmatprep.subr.bf16.mxu0 0
        %1306 = vmatpush1.bf16.msra.mxu0 0
        %1307 = vmatprep.subr.bf16.mxu0 0
        %1308 = vmatpush1.bf16.msra.mxu0 0
        %1309 = vmatprep.subr.bf16.mxu0 0
        %1310 = vmatpush1.bf16.msra.mxu0 0
        %1311 = vmatprep.subr.bf16.mxu0 0
        %1312 = vmatpush1.bf16.msra.mxu0 %v1295
        %1313 = vmatprep.subr.bf16.mxu0 0
        %1314 = vmatpush2.bf16.msra.mxu0 0
        %1315 = vmatprep.subr.bf16.mxu0 0
        %1316 = vmatpush2.bf16.msra.mxu0 0
        %1317 = vmatprep.subr.bf16.mxu0 0
        %1318 = vmatpush2.bf16.msra.mxu0 0
        %1319 = vmatprep.subr.bf16.mxu0 0
        %1320 = vmatpush2.bf16.msra.mxu0 0
        %1321 = vmatprep.subr.bf16.mxu0 0
        %1322 = vmatpush2.bf16.msra.mxu0 0
        %1323 = vmatprep.subr.bf16.mxu0 0
        %1324 = vmatpush2.bf16.msra.mxu0 0
        %1325 = vmatprep.subr.bf16.mxu0 0
        %1326 = vmatpush2.bf16.msra.mxu0 0
        %1327 = vmatprep.subr.bf16.mxu0 0
        %1328 = vmatpush2.bf16.msra.mxu0 0
        %1329 = vmatprep.mubr.bf16.mxu0 0
        %1330 = vmatmul.mubr.bf16.gmra.mxu0 %v1292
        %v1331 = vpop.f32.mrf.mxu0
        %v1332 = vadd.f32 0.0, %v1331
        %v1333 = vpop.f32.mrf.mxu0
        %v1334 = vpop.f32.mrf.mxu0
        %v1335 = vpop.f32.mrf.mxu0
        %1336 = vdwg.mxu0
        %v1337 = vrcp.pop %v1287
        %v1338 = vmul.f32 %v1332, %v1337
        %1340 = vrot.lane.b32.xlu0 %v1338, 24
        %v1341 = vpop.permute.xlu0 %1340
        %vm1343 = vcmask 261312
        %1344 = vst.msk [vmem:[#allocation3] sm:$0xff] %vm1343, %v1341
        %v1345 = vpack.c.bf16 %v881, %v881
        %1347 = vrot.lane.b32.xlu0 %v1345, 96
        %v1348 = vpop.permute.xlu0 %1347
        %v1350 = vsel %vm888, %v1345, 0
        %v1353 = vsel %vm888, %v1348, 0
        %1355 = vmatprep.subr.bf16.mxu0 0
        %1356 = vmatpush1.bf16.xpose.msra.mxu0 0
        %1357 = vmatprep.subr.bf16.mxu0 0
        %1358 = vmatpush1.bf16.xpose.msra.mxu0 0
        %1359 = vmatprep.subr.bf16.mxu0 0
        %1360 = vmatpush1.bf16.xpose.msra.mxu0 0
        %1361 = vmatprep.subr.bf16.mxu0 0
        %1362 = vmatpush1.bf16.xpose.msra.mxu0 0
        %1363 = vmatprep.subr.bf16.mxu0 0
        %1364 = vmatpush1.bf16.xpose.msra.mxu0 0
        %1365 = vmatprep.subr.bf16.mxu0 0
        %1366 = vmatpush1.bf16.xpose.msra.mxu0 0
        %1367 = vmatprep.subr.bf16.mxu0 0
        %1368 = vmatpush1.bf16.xpose.msra.mxu0 0
        %1369 = vmatprep.subr.bf16.mxu0 0
        %1370 = vmatpush1.bf16.xpose.msra.mxu0 %v1353
        %1371 = vmatprep.subr.bf16.mxu0 0
        %1372 = vmatpush2.bf16.xpose.msra.mxu0 0
        %1373 = vmatprep.subr.bf16.mxu0 0
        %1374 = vmatpush2.bf16.xpose.msra.mxu0 0
        %1375 = vmatprep.subr.bf16.mxu0 0
        %1376 = vmatpush2.bf16.xpose.msra.mxu0 0
        %1377 = vmatprep.subr.bf16.mxu0 0
        %1378 = vmatpush2.bf16.xpose.msra.mxu0 0
        %1379 = vmatprep.subr.bf16.mxu0 0
        %1380 = vmatpush2.bf16.xpose.msra.mxu0 0
        %1381 = vmatprep.subr.bf16.mxu0 0
        %1382 = vmatpush2.bf16.xpose.msra.mxu0 0
        %1383 = vmatprep.subr.bf16.mxu0 0
        %1384 = vmatpush2.bf16.xpose.msra.mxu0 0
        %1385 = vmatprep.subr.bf16.mxu0 0
        %1386 = vmatpush2.bf16.xpose.msra.mxu0 0
        %1387 = vmatprep.mubr.bf16.mxu0 0
        %1388 = vmatmul.mubr.bf16.gmra.mxu0 %v1350
        %v1389 = vpop.f32.mrf.mxu0
        %v1390 = vadd.f32 0.0, %v1389
        %v1391 = vpop.f32.mrf.mxu0
        %v1392 = vpop.f32.mrf.mxu0
        %v1393 = vpop.f32.mrf.mxu0
        %1394 = vdwg.mxu0
        %v1395 = vsel %vm888, %v1390, -inf
        %1396 = vmax.xlane.f32.xlu0 %v1395
        %v1397 = vpop.xlane.xlu0 %1396
        %v1398 = vsub.f32 %v1390, %v1397
        %v1399 = vmul.f32 %v1398, 1.442695
        %v1400 = vpow.pop %v1399
        %v1401 = vsel %vm888, %v1400, 0.0
        %1402 = vadd.xlane.f32.xlu0 %v1401
        %v1403 = vpop.xlane.xlu0 %1402
        %v1404 = vpack.c.bf16 %v1400, %v1400
        %1405 = vrot.lane.b32.xlu0 %v1345, 64
        %v1406 = vpop.permute.xlu0 %1405
        %v1408 = vsel %vm888, %v1404, 0
        %v1411 = vsel %vm950, %v1406, 0
        %1413 = vmatprep.subr.bf16.mxu0 0
        %1414 = vmatpush1.bf16.msra.mxu0 0
        %1415 = vmatprep.subr.bf16.mxu0 0
        %1416 = vmatpush1.bf16.msra.mxu0 0
        %1417 = vmatprep.subr.bf16.mxu0 0
        %1418 = vmatpush1.bf16.msra.mxu0 0
        %1419 = vmatprep.subr.bf16.mxu0 0
        %1420 = vmatpush1.bf16.msra.mxu0 0
        %1421 = vmatprep.subr.bf16.mxu0 0
        %1422 = vmatpush1.bf16.msra.mxu0 0
        %1423 = vmatprep.subr.bf16.mxu0 0
        %1424 = vmatpush1.bf16.msra.mxu0 0
        %1425 = vmatprep.subr.bf16.mxu0 0
        %1426 = vmatpush1.bf16.msra.mxu0 0
        %1427 = vmatprep.subr.bf16.mxu0 0
        %1428 = vmatpush1.bf16.msra.mxu0 %v1411
        %1429 = vmatprep.subr.bf16.mxu0 0
        %1430 = vmatpush2.bf16.msra.mxu0 0
        %1431 = vmatprep.subr.bf16.mxu0 0
        %1432 = vmatpush2.bf16.msra.mxu0 0
        %1433 = vmatprep.subr.bf16.mxu0 0
        %1434 = vmatpush2.bf16.msra.mxu0 0
        %1435 = vmatprep.subr.bf16.mxu0 0
        %1436 = vmatpush2.bf16.msra.mxu0 0
        %1437 = vmatprep.subr.bf16.mxu0 0
        %1438 = vmatpush2.bf16.msra.mxu0 0
        %1439 = vmatprep.subr.bf16.mxu0 0
        %1440 = vmatpush2.bf16.msra.mxu0 0
        %1441 = vmatprep.subr.bf16.mxu0 0
        %1442 = vmatpush2.bf16.msra.mxu0 0
        %1443 = vmatprep.subr.bf16.mxu0 0
        %1444 = vmatpush2.bf16.msra.mxu0 0
        %1445 = vmatprep.mubr.bf16.mxu0 0
        %1446 = vmatmul.mubr.bf16.gmra.mxu0 %v1408
        %v1447 = vpop.f32.mrf.mxu0
        %v1448 = vadd.f32 0.0, %v1447
        %v1449 = vpop.f32.mrf.mxu0
        %v1450 = vpop.f32.mrf.mxu0
        %v1451 = vpop.f32.mrf.mxu0
        %1452 = vdwg.mxu0
        %v1453 = vrcp.pop %v1403
        %v1454 = vmul.f32 %v1448, %v1453
        %1455 = vst.msk [vmem:[#allocation3 + $0x8] sm:$0xff] %vm888, %v1454
        %1456 = vrot.lane.b32.xlu0 %v1345, 120
        %v1457 = vpop.permute.xlu0 %1456
        %1458 = vrot.lane.b32.xlu0 %v1345, 88
        %v1459 = vpop.permute.xlu0 %1458
        %v1461 = vsel %vm888, %v1457, 0
        %v1464 = vsel %vm888, %v1459, 0
        %1466 = vmatprep.subr.bf16.mxu0 0
        %1467 = vmatpush1.bf16.xpose.msra.mxu0 0
        %1468 = vmatprep.subr.bf16.mxu0 0
        %1469 = vmatpush1.bf16.xpose.msra.mxu0 0
        %1470 = vmatprep.subr.bf16.mxu0 0
        %1471 = vmatpush1.bf16.xpose.msra.mxu0 0
        %1472 = vmatprep.subr.bf16.mxu0 0
        %1473 = vmatpush1.bf16.xpose.msra.mxu0 0
        %1474 = vmatprep.subr.bf16.mxu0 0
        %1475 = vmatpush1.bf16.xpose.msra.mxu0 0
        %1476 = vmatprep.subr.bf16.mxu0 0
        %1477 = vmatpush1.bf16.xpose.msra.mxu0 0
        %1478 = vmatprep.subr.bf16.mxu0 0
        %1479 = vmatpush1.bf16.xpose.msra.mxu0 0
        %1480 = vmatprep.subr.bf16.mxu0 0
        %1481 = vmatpush1.bf16.xpose.msra.mxu0 %v1464
        %1482 = vmatprep.subr.bf16.mxu0 0
        %1483 = vmatpush2.bf16.xpose.msra.mxu0 0
        %1484 = vmatprep.subr.bf16.mxu0 0
        %1485 = vmatpush2.bf16.xpose.msra.mxu0 0
        %1486 = vmatprep.subr.bf16.mxu0 0
        %1487 = vmatpush2.bf16.xpose.msra.mxu0 0
        %1488 = vmatprep.subr.bf16.mxu0 0
        %1489 = vmatpush2.bf16.xpose.msra.mxu0 0
        %1490 = vmatprep.subr.bf16.mxu0 0
        %1491 = vmatpush2.bf16.xpose.msra.mxu0 0
        %1492 = vmatprep.subr.bf16.mxu0 0
        %1493 = vmatpush2.bf16.xpose.msra.mxu0 0
        %1494 = vmatprep.subr.bf16.mxu0 0
        %1495 = vmatpush2.bf16.xpose.msra.mxu0 0
        %1496 = vmatprep.subr.bf16.mxu0 0
        %1497 = vmatpush2.bf16.xpose.msra.mxu0 0
        %1498 = vmatprep.mubr.bf16.mxu0 0
        %1499 = vmatmul.mubr.bf16.gmra.mxu0 %v1461
        %v1500 = vpop.f32.mrf.mxu0
        %v1501 = vadd.f32 0.0, %v1500
        %v1502 = vpop.f32.mrf.mxu0
        %v1503 = vpop.f32.mrf.mxu0
        %v1504 = vpop.f32.mrf.mxu0
        %1505 = vdwg.mxu0
        %v1506 = vsel %vm888, %v1501, -inf
        %1507 = vmax.xlane.f32.xlu0 %v1506
        %v1508 = vpop.xlane.xlu0 %1507
        %v1509 = vsub.f32 %v1501, %v1508
        %v1510 = vmul.f32 %v1509, 1.442695
        %v1511 = vpow.pop %v1510
        %v1512 = vsel %vm888, %v1511, 0.0
        %1513 = vadd.xlane.f32.xlu0 %v1512
        %v1514 = vpop.xlane.xlu0 %1513
        %v1515 = vpack.c.bf16 %v1511, %v1511
        %1516 = vrot.lane.b32.xlu0 %v1345, 56
        %v1517 = vpop.permute.xlu0 %1516
        %v1519 = vsel %vm888, %v1515, 0
        %v1522 = vsel %vm950, %v1517, 0
        %1524 = vmatprep.subr.bf16.mxu0 0
        %1525 = vmatpush1.bf16.msra.mxu0 0
        %1526 = vmatprep.subr.bf16.mxu0 0
        %1527 = vmatpush1.bf16.msra.mxu0 0
        %1528 = vmatprep.subr.bf16.mxu0 0
        %1529 = vmatpush1.bf16.msra.mxu0 0
        %1530 = vmatprep.subr.bf16.mxu0 0
        %1531 = vmatpush1.bf16.msra.mxu0 0
        %1532 = vmatprep.subr.bf16.mxu0 0
        %1533 = vmatpush1.bf16.msra.mxu0 0
        %1534 = vmatprep.subr.bf16.mxu0 0
        %1535 = vmatpush1.bf16.msra.mxu0 0
        %1536 = vmatprep.subr.bf16.mxu0 0
        %1537 = vmatpush1.bf16.msra.mxu0 0
        %1538 = vmatprep.subr.bf16.mxu0 0
        %1539 = vmatpush1.bf16.msra.mxu0 %v1522
        %1540 = vmatprep.subr.bf16.mxu0 0
        %1541 = vmatpush2.bf16.msra.mxu0 0
        %1542 = vmatprep.subr.bf16.mxu0 0
        %1543 = vmatpush2.bf16.msra.mxu0 0
        %1544 = vmatprep.subr.bf16.mxu0 0
        %1545 = vmatpush2.bf16.msra.mxu0 0
        %1546 = vmatprep.subr.bf16.mxu0 0
        %1547 = vmatpush2.bf16.msra.mxu0 0
        %1548 = vmatprep.subr.bf16.mxu0 0
        %1549 = vmatpush2.bf16.msra.mxu0 0
        %1550 = vmatprep.subr.bf16.mxu0 0
        %1551 = vmatpush2.bf16.msra.mxu0 0
        %1552 = vmatprep.subr.bf16.mxu0 0
        %1553 = vmatpush2.bf16.msra.mxu0 0
        %1554 = vmatprep.subr.bf16.mxu0 0
        %1555 = vmatpush2.bf16.msra.mxu0 0
        %1556 = vmatprep.mubr.bf16.mxu0 0
        %1557 = vmatmul.mubr.bf16.gmra.mxu0 %v1519
        %v1558 = vpop.f32.mrf.mxu0
        %v1559 = vadd.f32 0.0, %v1558
        %v1560 = vpop.f32.mrf.mxu0
        %v1561 = vpop.f32.mrf.mxu0
        %v1562 = vpop.f32.mrf.mxu0
        %1563 = vdwg.mxu0
        %v1564 = vrcp.pop %v1514
        %v1565 = vmul.f32 %v1559, %v1564
        %1567 = vrot.lane.b32.xlu0 %v1565, 8
        %v1568 = vpop.permute.xlu0 %1567
        %1570 = vst.msk [vmem:[#allocation3 + $0x8] sm:$0xff] %vm1111, %v1568
        %1571 = vrot.lane.b32.xlu0 %v1345, 112
        %v1572 = vpop.permute.xlu0 %1571
        %1573 = vrot.lane.b32.xlu0 %v1345, 80
        %v1574 = vpop.permute.xlu0 %1573
        %v1576 = vsel %vm888, %v1572, 0
        %v1579 = vsel %vm888, %v1574, 0
        %1581 = vmatprep.subr.bf16.mxu0 0
        %1582 = vmatpush1.bf16.xpose.msra.mxu0 0
        %1583 = vmatprep.subr.bf16.mxu0 0
        %1584 = vmatpush1.bf16.xpose.msra.mxu0 0
        %1585 = vmatprep.subr.bf16.mxu0 0
        %1586 = vmatpush1.bf16.xpose.msra.mxu0 0
        %1587 = vmatprep.subr.bf16.mxu0 0
        %1588 = vmatpush1.bf16.xpose.msra.mxu0 0
        %1589 = vmatprep.subr.bf16.mxu0 0
        %1590 = vmatpush1.bf16.xpose.msra.mxu0 0
        %1591 = vmatprep.subr.bf16.mxu0 0
        %1592 = vmatpush1.bf16.xpose.msra.mxu0 0
        %1593 = vmatprep.subr.bf16.mxu0 0
        %1594 = vmatpush1.bf16.xpose.msra.mxu0 0
        %1595 = vmatprep.subr.bf16.mxu0 0
        %1596 = vmatpush1.bf16.xpose.msra.mxu0 %v1579
        %1597 = vmatprep.subr.bf16.mxu0 0
        %1598 = vmatpush2.bf16.xpose.msra.mxu0 0
        %1599 = vmatprep.subr.bf16.mxu0 0
        %1600 = vmatpush2.bf16.xpose.msra.mxu0 0
        %1601 = vmatprep.subr.bf16.mxu0 0
        %1602 = vmatpush2.bf16.xpose.msra.mxu0 0
        %1603 = vmatprep.subr.bf16.mxu0 0
        %1604 = vmatpush2.bf16.xpose.msra.mxu0 0
        %1605 = vmatprep.subr.bf16.mxu0 0
        %1606 = vmatpush2.bf16.xpose.msra.mxu0 0
        %1607 = vmatprep.subr.bf16.mxu0 0
        %1608 = vmatpush2.bf16.xpose.msra.mxu0 0
        %1609 = vmatprep.subr.bf16.mxu0 0
        %1610 = vmatpush2.bf16.xpose.msra.mxu0 0
        %1611 = vmatprep.subr.bf16.mxu0 0
        %1612 = vmatpush2.bf16.xpose.msra.mxu0 0
        %1613 = vmatprep.mubr.bf16.mxu0 0
        %1614 = vmatmul.mubr.bf16.gmra.mxu0 %v1576
        %v1615 = vpop.f32.mrf.mxu0
        %v1616 = vadd.f32 0.0, %v1615
        %v1617 = vpop.f32.mrf.mxu0
        %v1618 = vpop.f32.mrf.mxu0
        %v1619 = vpop.f32.mrf.mxu0
        %1620 = vdwg.mxu0
        %v1621 = vsel %vm888, %v1616, -inf
        %1622 = vmax.xlane.f32.xlu0 %v1621
        %v1623 = vpop.xlane.xlu0 %1622
        %v1624 = vsub.f32 %v1616, %v1623
        %v1625 = vmul.f32 %v1624, 1.442695
        %v1626 = vpow.pop %v1625
        %v1627 = vsel %vm888, %v1626, 0.0
        %1628 = vadd.xlane.f32.xlu0 %v1627
        %v1629 = vpop.xlane.xlu0 %1628
        %v1630 = vpack.c.bf16 %v1626, %v1626
        %1631 = vrot.lane.b32.xlu0 %v1345, 48
        %v1632 = vpop.permute.xlu0 %1631
        %v1634 = vsel %vm888, %v1630, 0
        %v1637 = vsel %vm950, %v1632, 0
        %1639 = vmatprep.subr.bf16.mxu0 0
        %1640 = vmatpush1.bf16.msra.mxu0 0
        %1641 = vmatprep.subr.bf16.mxu0 0
        %1642 = vmatpush1.bf16.msra.mxu0 0
        %1643 = vmatprep.subr.bf16.mxu0 0
        %1644 = vmatpush1.bf16.msra.mxu0 0
        %1645 = vmatprep.subr.bf16.mxu0 0
        %1646 = vmatpush1.bf16.msra.mxu0 0
        %1647 = vmatprep.subr.bf16.mxu0 0
        %1648 = vmatpush1.bf16.msra.mxu0 0
        %1649 = vmatprep.subr.bf16.mxu0 0
        %1650 = vmatpush1.bf16.msra.mxu0 0
        %1651 = vmatprep.subr.bf16.mxu0 0
        %1652 = vmatpush1.bf16.msra.mxu0 0
        %1653 = vmatprep.subr.bf16.mxu0 0
        %1654 = vmatpush1.bf16.msra.mxu0 %v1637
        %1655 = vmatprep.subr.bf16.mxu0 0
        %1656 = vmatpush2.bf16.msra.mxu0 0
        %1657 = vmatprep.subr.bf16.mxu0 0
        %1658 = vmatpush2.bf16.msra.mxu0 0
        %1659 = vmatprep.subr.bf16.mxu0 0
        %1660 = vmatpush2.bf16.msra.mxu0 0
        %1661 = vmatprep.subr.bf16.mxu0 0
        %1662 = vmatpush2.bf16.msra.mxu0 0
        %1663 = vmatprep.subr.bf16.mxu0 0
        %1664 = vmatpush2.bf16.msra.mxu0 0
        %1665 = vmatprep.subr.bf16.mxu0 0
        %1666 = vmatpush2.bf16.msra.mxu0 0
        %1667 = vmatprep.subr.bf16.mxu0 0
        %1668 = vmatpush2.bf16.msra.mxu0 0
        %1669 = vmatprep.subr.bf16.mxu0 0
        %1670 = vmatpush2.bf16.msra.mxu0 0
        %1671 = vmatprep.mubr.bf16.mxu0 0
        %1672 = vmatmul.mubr.bf16.gmra.mxu0 %v1634
        %v1673 = vpop.f32.mrf.mxu0
        %v1674 = vadd.f32 0.0, %v1673
        %v1675 = vpop.f32.mrf.mxu0
        %v1676 = vpop.f32.mrf.mxu0
        %v1677 = vpop.f32.mrf.mxu0
        %1678 = vdwg.mxu0
        %v1679 = vrcp.pop %v1629
        %v1680 = vmul.f32 %v1674, %v1679
        %1682 = vrot.lane.b32.xlu0 %v1680, 16
        %v1683 = vpop.permute.xlu0 %1682
        %1685 = vst.msk [vmem:[#allocation3 + $0x8] sm:$0xff] %vm1227, %v1683
        %1686 = vrot.lane.b32.xlu0 %v1345, 104
        %v1687 = vpop.permute.xlu0 %1686
        %1688 = vrot.lane.b32.xlu0 %v1345, 72
        %v1689 = vpop.permute.xlu0 %1688
        %v1691 = vsel %vm888, %v1687, 0
        %v1694 = vsel %vm888, %v1689, 0
        %1696 = vmatprep.subr.bf16.mxu0 0
        %1697 = vmatpush1.bf16.xpose.msra.mxu0 0
        %1698 = vmatprep.subr.bf16.mxu0 0
        %1699 = vmatpush1.bf16.xpose.msra.mxu0 0
        %1700 = vmatprep.subr.bf16.mxu0 0
        %1701 = vmatpush1.bf16.xpose.msra.mxu0 0
        %1702 = vmatprep.subr.bf16.mxu0 0
        %1703 = vmatpush1.bf16.xpose.msra.mxu0 0
        %1704 = vmatprep.subr.bf16.mxu0 0
        %1705 = vmatpush1.bf16.xpose.msra.mxu0 0
        %1706 = vmatprep.subr.bf16.mxu0 0
        %1707 = vmatpush1.bf16.xpose.msra.mxu0 0
        %1708 = vmatprep.subr.bf16.mxu0 0
        %1709 = vmatpush1.bf16.xpose.msra.mxu0 0
        %1710 = vmatprep.subr.bf16.mxu0 0
        %1711 = vmatpush1.bf16.xpose.msra.mxu0 %v1694
        %1712 = vmatprep.subr.bf16.mxu0 0
        %1713 = vmatpush2.bf16.xpose.msra.mxu0 0
        %1714 = vmatprep.subr.bf16.mxu0 0
        %1715 = vmatpush2.bf16.xpose.msra.mxu0 0
        %1716 = vmatprep.subr.bf16.mxu0 0
        %1717 = vmatpush2.bf16.xpose.msra.mxu0 0
        %1718 = vmatprep.subr.bf16.mxu0 0
        %1719 = vmatpush2.bf16.xpose.msra.mxu0 0
        %1720 = vmatprep.subr.bf16.mxu0 0
        %1721 = vmatpush2.bf16.xpose.msra.mxu0 0
        %1722 = vmatprep.subr.bf16.mxu0 0
        %1723 = vmatpush2.bf16.xpose.msra.mxu0 0
        %1724 = vmatprep.subr.bf16.mxu0 0
        %1725 = vmatpush2.bf16.xpose.msra.mxu0 0
        %1726 = vmatprep.subr.bf16.mxu0 0
        %1727 = vmatpush2.bf16.xpose.msra.mxu0 0
        %1728 = vmatprep.mubr.bf16.mxu0 0
        %1729 = vmatmul.mubr.bf16.gmra.mxu0 %v1691
        %v1730 = vpop.f32.mrf.mxu0
        %v1731 = vadd.f32 0.0, %v1730
        %v1732 = vpop.f32.mrf.mxu0
        %v1733 = vpop.f32.mrf.mxu0
        %v1734 = vpop.f32.mrf.mxu0
        %1735 = vdwg.mxu0
        %v1736 = vsel %vm888, %v1731, -inf
        %1737 = vmax.xlane.f32.xlu0 %v1736
        %v1738 = vpop.xlane.xlu0 %1737
        %v1739 = vsub.f32 %v1731, %v1738
        %v1740 = vmul.f32 %v1739, 1.442695
        %v1741 = vpow.pop %v1740
        %v1742 = vsel %vm888, %v1741, 0.0
        %1743 = vadd.xlane.f32.xlu0 %v1742
        %v1744 = vpop.xlane.xlu0 %1743
        %v1745 = vpack.c.bf16 %v1741, %v1741
        %1746 = vrot.lane.b32.xlu0 %v1345, 40
        %v1747 = vpop.permute.xlu0 %1746
        %v1749 = vsel %vm888, %v1745, 0
        %v1752 = vsel %vm950, %v1747, 0
        %1754 = vmatprep.subr.bf16.mxu0 0
        %1755 = vmatpush1.bf16.msra.mxu0 0
        %1756 = vmatprep.subr.bf16.mxu0 0
        %1757 = vmatpush1.bf16.msra.mxu0 0
        %1758 = vmatprep.subr.bf16.mxu0 0
        %1759 = vmatpush1.bf16.msra.mxu0 0
        %1760 = vmatprep.subr.bf16.mxu0 0
        %1761 = vmatpush1.bf16.msra.mxu0 0
        %1762 = vmatprep.subr.bf16.mxu0 0
        %1763 = vmatpush1.bf16.msra.mxu0 0
        %1764 = vmatprep.subr.bf16.mxu0 0
        %1765 = vmatpush1.bf16.msra.mxu0 0
        %1766 = vmatprep.subr.bf16.mxu0 0
        %1767 = vmatpush1.bf16.msra.mxu0 0
        %1768 = vmatprep.subr.bf16.mxu0 0
        %1769 = vmatpush1.bf16.msra.mxu0 %v1752
        %1770 = vmatprep.subr.bf16.mxu0 0
        %1771 = vmatpush2.bf16.msra.mxu0 0
        %1772 = vmatprep.subr.bf16.mxu0 0
        %1773 = vmatpush2.bf16.msra.mxu0 0
        %1774 = vmatprep.subr.bf16.mxu0 0
        %1775 = vmatpush2.bf16.msra.mxu0 0
        %1776 = vmatprep.subr.bf16.mxu0 0
        %1777 = vmatpush2.bf16.msra.mxu0 0
        %1778 = vmatprep.subr.bf16.mxu0 0
        %1779 = vmatpush2.bf16.msra.mxu0 0
        %1780 = vmatprep.subr.bf16.mxu0 0
        %1781 = vmatpush2.bf16.msra.mxu0 0
        %1782 = vmatprep.subr.bf16.mxu0 0
        %1783 = vmatpush2.bf16.msra.mxu0 0
        %1784 = vmatprep.subr.bf16.mxu0 0
        %1785 = vmatpush2.bf16.msra.mxu0 0
        %1786 = vmatprep.mubr.bf16.mxu0 0
        %1787 = vmatmul.mubr.bf16.gmra.mxu0 %v1749
        %v1788 = vpop.f32.mrf.mxu0
        %v1789 = vadd.f32 0.0, %v1788
        %v1790 = vpop.f32.mrf.mxu0
        %v1791 = vpop.f32.mrf.mxu0
        %v1792 = vpop.f32.mrf.mxu0
        %1793 = vdwg.mxu0
        %v1794 = vrcp.pop %v1744
        %v1795 = vmul.f32 %v1789, %v1794
        %1797 = vrot.lane.b32.xlu0 %v1795, 24
        %v1798 = vpop.permute.xlu0 %1797
        %1800 = vst.msk [vmem:[#allocation3 + $0x8] sm:$0xff] %vm1343, %v1798
        %v1801 = vld [vmem:[#allocation3] sm:$0xff]
        %v1802 = vld [vmem:[#allocation3 + $0x8] sm:$0xff]
        %v1803 = vpack.c.bf16 %v1802, %v1801
        %v1804 = vld [vmem:[%s590] sm:$0xf]
        %v1805 = vld [vmem:[%s590 + $0x4] sm:$0xf]
        %v1806 = vld [vmem:[%s590 + $0x8] sm:$0xf]
        %v1807 = vld [vmem:[%s590 + $0xc] sm:$0xf]
        %v1812 = vunpack.c.l.b16 %v1804
        %v1813 = vunpack.c.l.b16 %v1805
        %v1814 = vunpack.c.l.b16 %v1806
        %v1815 = vunpack.c.l.b16 %v1807
        %v1816 = vpack.c.b16 %v1813, %v1812
        %v1817 = vpack.c.b16 %v1815, %v1814
        %vm1820 = vcmask 261120
        %v1822 = vsel %vm1820, %v1803, 0
        %1824 = vmatprep.subr.bf16.mxu0 0
        %1825 = vmatpush1.bf16.msra.mxu0 0
        %1826 = vmatprep.subr.bf16.mxu0 0
        %1827 = vmatpush1.bf16.msra.mxu0 0
        %1828 = vmatprep.subr.bf16.mxu0 0
        %1829 = vmatpush1.bf16.msra.mxu0 0
        %1830 = vmatprep.subr.bf16.mxu0 0
        %1831 = vmatpush1.bf16.msra.mxu0 0
        %1832 = vmatprep.subr.bf16.mxu0 0
        %1833 = vmatpush1.bf16.msra.mxu0 0
        %1834 = vmatprep.subr.bf16.mxu0 0
        %1835 = vmatpush1.bf16.msra.mxu0 0
        %1836 = vmatprep.subr.bf16.mxu0 0
        %1837 = vmatpush1.bf16.msra.mxu0 %v1817
        %1838 = vmatprep.subr.bf16.mxu0 0
        %1839 = vmatpush1.bf16.msra.mxu0 %v1816
        %1840 = vmatprep.subr.bf16.mxu0 0
        %1841 = vmatpush2.bf16.msra.mxu0 0
        %1842 = vmatprep.subr.bf16.mxu0 0
        %1843 = vmatpush2.bf16.msra.mxu0 0
        %1844 = vmatprep.subr.bf16.mxu0 0
        %1845 = vmatpush2.bf16.msra.mxu0 0
        %1846 = vmatprep.subr.bf16.mxu0 0
        %1847 = vmatpush2.bf16.msra.mxu0 0
        %1848 = vmatprep.subr.bf16.mxu0 0
        %1849 = vmatpush2.bf16.msra.mxu0 0
        %1850 = vmatprep.subr.bf16.mxu0 0
        %1851 = vmatpush2.bf16.msra.mxu0 0
        %1852 = vmatprep.subr.bf16.mxu0 0
        %1853 = vmatpush2.bf16.msra.mxu0 0
        %1854 = vmatprep.subr.bf16.mxu0 0
        %1855 = vmatpush2.bf16.msra.mxu0 0
        %1856 = vmatprep.mubr.bf16.mxu0 0
        %1857 = vmatmul.mubr.bf16.gmra.mxu0 %v1822
        %v1858 = vpop.f32.mrf.mxu0
        %v1859 = vadd.f32 0.0, %v1858
        %v1860 = vpop.f32.mrf.mxu0
        %v1861 = vpop.f32.mrf.mxu0
        %v1862 = vadd.f32 0.0, %v1861
        %v1863 = vpop.f32.mrf.mxu0
        %1864 = vdwg.mxu0
        %v1865 = vadd.f32 %v732, %v1859
        %v1866 = vadd.f32 %v733, %v1862
        %v1867 = vld [vmem:[%s701] sm:$0x1]
        %v1869 = vlaneseq
        %v1870 = vshrl.u32 %v1869, 7
        %v1871 = vsub.s32 0, %v1870
        %v1872 = vrot.slane %v1867, %v1871
        %v1874 = vadd.f32 %v1865, %v1872
        %v1875 = vadd.f32 %v1866, %v1872
        %v1876 = vld [vmem:[%s704] sm:$0x1]
        %v1877 = vld [vmem:[%s598] sm:$0x1]
        %1878 = vadd.xlane.f32.xlu0 %v1874
        %v1879 = vpop.xlane.xlu0 %1878
        %1880 = vadd.xlane.f32.xlu0 %v1875
        %v1881 = vpop.xlane.xlu0 %1880
        %v1882 = vmul.f32 %v1879, 0.03125
        %v1883 = vmul.f32 %v1881, 0.03125
        %v1884 = vmul.f32 %v1874, %v1874
        %v1885 = vmul.f32 %v1875, %v1875
        %1886 = vadd.xlane.f32.xlu0 %v1884
        %v1887 = vpop.xlane.xlu0 %1886
        %1888 = vadd.xlane.f32.xlu0 %v1885
        %v1889 = vpop.xlane.xlu0 %1888
        %v1890 = vmul.f32 %v1887, 0.03125
        %v1891 = vmul.f32 %v1889, 0.03125
        %v1892 = vmul.f32 %v1882, %v1882
        %v1893 = vmul.f32 %v1883, %v1883
        %v1894 = vsub.f32 %v1890, %v1892
        %v1895 = vsub.f32 %v1891, %v1893
        %v1896 = vsub.f32 %v1874, %v1882
        %v1897 = vsub.f32 %v1875, %v1883
        %v1898 = vadd.f32 %v1894, 1e-05
        %v1899 = vadd.f32 %v1895, 1e-05
        %v1900 = vrsqrt.pop %v1898
        %v1901 = vrsqrt.pop %v1899
        %v1902 = vmul.f32 %v1896, %v1900
        %v1903 = vmul.f32 %v1897, %v1901
        %v1905 = vlaneseq
        %v1906 = vshrl.u32 %v1905, 7
        %v1907 = vsub.s32 0, %v1906
        %v1908 = vrot.slane %v1876, %v1907
        %v1910 = vmul.f32 %v1902, %v1908
        %v1911 = vmul.f32 %v1903, %v1908
        %v1913 = vlaneseq
        %v1914 = vshrl.u32 %v1913, 7
        %v1915 = vsub.s32 0, %v1914
        %v1916 = vrot.slane %v1877, %v1915
        %v1918 = vadd.f32 %v1910, %v1916
        %v1919 = vadd.f32 %v1911, %v1916
        %v1920 = vpack.c.bf16 %v1919, %v1918
        %v1921 = vld [vmem:[%s709] sm:$0xf]
        %v1922 = vld [vmem:[%s709 + $0x4] sm:$0xf]
        %v1923 = vld [vmem:[%s709 + $0x8] sm:$0xf]
        %v1924 = vld [vmem:[%s709 + $0xc] sm:$0xf]
        %v1925 = vld [vmem:[%s709 + $0x10] sm:$0xf]
        %v1926 = vld [vmem:[%s709 + $0x14] sm:$0xf]
        %v1927 = vld [vmem:[%s709 + $0x18] sm:$0xf]
        %v1928 = vld [vmem:[%s709 + $0x1c] sm:$0xf]
        %v1929 = vld [vmem:[%s709 + $0x20] sm:$0xf]
        %v1930 = vld [vmem:[%s709 + $0x24] sm:$0xf]
        %v1931 = vld [vmem:[%s709 + $0x28] sm:$0xf]
        %v1932 = vld [vmem:[%s709 + $0x2c] sm:$0xf]
        %v1933 = vld [vmem:[%s709 + $0x30] sm:$0xf]
        %v1934 = vld [vmem:[%s709 + $0x34] sm:$0xf]
        %v1935 = vld [vmem:[%s709 + $0x38] sm:$0xf]
        %v1936 = vld [vmem:[%s709 + $0x3c] sm:$0xf]
        %v1937 = vld [vmem:[%s712] sm:$0x1]
        %v1939 = vlaneseq
        %v1940 = vshrl.u32 %v1939, 7
        %v1941 = vsub.s32 0, %v1940
        %v1942 = vrot.slane %v1937, %v1941
        %v1960 = vunpack.c.l.b16 %v1921
        %v1961 = vunpack.c.l.b16 %v1922
        %v1962 = vunpack.c.l.b16 %v1923
        %v1963 = vunpack.c.l.b16 %v1924
        %v1964 = vunpack.c.l.b16 %v1925
        %v1965 = vunpack.c.l.b16 %v1926
        %v1966 = vunpack.c.l.b16 %v1927
        %v1967 = vunpack.c.l.b16 %v1928
        %v1968 = vunpack.c.l.b16 %v1929
        %v1969 = vunpack.c.l.b16 %v1930
        %v1970 = vunpack.c.l.b16 %v1931
        %v1971 = vunpack.c.l.b16 %v1932
        %v1972 = vunpack.c.l.b16 %v1933
        %v1973 = vunpack.c.l.b16 %v1934
        %v1974 = vunpack.c.l.b16 %v1935
        %v1975 = vunpack.c.l.b16 %v1936
        %v1976 = vpack.c.b16 %v1961, %v1960
        %v1977 = vpack.c.b16 %v1963, %v1962
        %v1978 = vpack.c.b16 %v1965, %v1964
        %v1979 = vpack.c.b16 %v1967, %v1966
        %v1980 = vpack.c.b16 %v1969, %v1968
        %v1981 = vpack.c.b16 %v1971, %v1970
        %v1982 = vpack.c.b16 %v1973, %v1972
        %v1983 = vpack.c.b16 %v1975, %v1974
        %1992 = vmatprep.subr.bf16.mxu0 0
        %1993 = vmatpush1.bf16.msra.mxu0 %v1983
        %1994 = vmatprep.subr.bf16.mxu0 0
        %1995 = vmatpush1.bf16.msra.mxu0 %v1982
        %1996 = vmatprep.subr.bf16.mxu0 0
        %1997 = vmatpush1.bf16.msra.mxu0 %v1981
        %1998 = vmatprep.subr.bf16.mxu0 0
        %1999 = vmatpush1.bf16.msra.mxu0 %v1980
        %2000 = vmatprep.subr.bf16.mxu0 0
        %2001 = vmatpush1.bf16.msra.mxu0 %v1979
        %2002 = vmatprep.subr.bf16.mxu0 0
        %2003 = vmatpush1.bf16.msra.mxu0 %v1978
        %2004 = vmatprep.subr.bf16.mxu0 0
        %2005 = vmatpush1.bf16.msra.mxu0 %v1977
        %2006 = vmatprep.subr.bf16.mxu0 0
        %2007 = vmatpush1.bf16.msra.mxu0 %v1976
        %2008 = vmatprep.subr.bf16.mxu0 0
        %2009 = vmatpush2.bf16.msra.mxu0 0
        %2010 = vmatprep.subr.bf16.mxu0 0
        %2011 = vmatpush2.bf16.msra.mxu0 0
        %2012 = vmatprep.subr.bf16.mxu0 0
        %2013 = vmatpush2.bf16.msra.mxu0 0
        %2014 = vmatprep.subr.bf16.mxu0 0
        %2015 = vmatpush2.bf16.msra.mxu0 0
        %2016 = vmatprep.subr.bf16.mxu0 0
        %2017 = vmatpush2.bf16.msra.mxu0 0
        %2018 = vmatprep.subr.bf16.mxu0 0
        %2019 = vmatpush2.bf16.msra.mxu0 0
        %2020 = vmatprep.subr.bf16.mxu0 0
        %2021 = vmatpush2.bf16.msra.mxu0 0
        %2022 = vmatprep.subr.bf16.mxu0 0
        %2023 = vmatpush2.bf16.msra.mxu0 0
        %2024 = vmatprep.mubr.bf16.mxu0 0
        %2025 = vmatmul.mubr.bf16.gmra.mxu0 %v1920
        %v2026 = vpop.f32.mrf.mxu0
        %v2027 = vadd.f32 %v1942, %v2026
        %v2028 = vpop.f32.mrf.mxu0
        %v2029 = vpop.f32.mrf.mxu0
        %v2030 = vadd.f32 %v1942, %v2029
        %v2031 = vpop.f32.mrf.mxu0
        %2032 = vdwg.mxu0
        %v2033 = vmul.f32 %v2027, 0.5
        %v2034 = vmul.f32 %v2030, 0.5
        %v2035 = vrcp.pop 1.4142135
        %v2036 = vmul.f32 %v2027, %v2035
        %v2037 = vmul.f32 %v2030, %v2035
        %v2038 = verf.f32.pop %v2036
        %v2039 = verf.f32.pop %v2037
        %v2040 = vadd.f32 %v2038, 1.0
        %v2041 = vadd.f32 %v2039, 1.0
        %v2042 = vmul.f32 %v2033, %v2040
        %v2043 = vmul.f32 %v2034, %v2041
        %v2044 = vpack.c.bf16 %v2043, %v2042
        %v2045 = vld [vmem:[%s717] sm:$0xf]
        %v2046 = vld [vmem:[%s717 + $0x4] sm:$0xf]
        %v2047 = vld [vmem:[%s717 + $0x8] sm:$0xf]
        %v2048 = vld [vmem:[%s717 + $0xc] sm:$0xf]
        %v2049 = vld [vmem:[%s717 + $0x10] sm:$0xf]
        %v2050 = vld [vmem:[%s717 + $0x14] sm:$0xf]
        %v2051 = vld [vmem:[%s717 + $0x18] sm:$0xf]
        %v2052 = vld [vmem:[%s717 + $0x1c] sm:$0xf]
        %v2053 = vld [vmem:[%s717 + $0x20] sm:$0xf]
        %v2054 = vld [vmem:[%s717 + $0x24] sm:$0xf]
        %v2055 = vld [vmem:[%s717 + $0x28] sm:$0xf]
        %v2056 = vld [vmem:[%s717 + $0x2c] sm:$0xf]
        %v2057 = vld [vmem:[%s717 + $0x30] sm:$0xf]
        %v2058 = vld [vmem:[%s717 + $0x34] sm:$0xf]
        %v2059 = vld [vmem:[%s717 + $0x38] sm:$0xf]
        %v2060 = vld [vmem:[%s717 + $0x3c] sm:$0xf]
        %v2077 = vunpack.c.l.b16 %v2045
        %v2078 = vunpack.c.l.b16 %v2046
        %v2079 = vunpack.c.l.b16 %v2047
        %v2080 = vunpack.c.l.b16 %v2048
        %v2081 = vunpack.c.l.b16 %v2049
        %v2082 = vunpack.c.l.b16 %v2050
        %v2083 = vunpack.c.l.b16 %v2051
        %v2084 = vunpack.c.l.b16 %v2052
        %v2085 = vunpack.c.l.b16 %v2053
        %v2086 = vunpack.c.l.b16 %v2054
        %v2087 = vunpack.c.l.b16 %v2055
        %v2088 = vunpack.c.l.b16 %v2056
        %v2089 = vunpack.c.l.b16 %v2057
        %v2090 = vunpack.c.l.b16 %v2058
        %v2091 = vunpack.c.l.b16 %v2059
        %v2092 = vunpack.c.l.b16 %v2060
        %v2093 = vpack.c.b16 %v2078, %v2077
        %v2094 = vpack.c.b16 %v2080, %v2079
        %v2095 = vpack.c.b16 %v2082, %v2081
        %v2096 = vpack.c.b16 %v2084, %v2083
        %v2097 = vpack.c.b16 %v2086, %v2085
        %v2098 = vpack.c.b16 %v2088, %v2087
        %v2099 = vpack.c.b16 %v2090, %v2089
        %v2100 = vpack.c.b16 %v2092, %v2091
        %2109 = vmatprep.subr.bf16.mxu0 0
        %2110 = vmatpush1.bf16.msra.mxu0 %v2100
        %2111 = vmatprep.subr.bf16.mxu0 0
        %2112 = vmatpush1.bf16.msra.mxu0 %v2099
        %2113 = vmatprep.subr.bf16.mxu0 0
        %2114 = vmatpush1.bf16.msra.mxu0 %v2098
        %2115 = vmatprep.subr.bf16.mxu0 0
        %2116 = vmatpush1.bf16.msra.mxu0 %v2097
        %2117 = vmatprep.subr.bf16.mxu0 0
        %2118 = vmatpush1.bf16.msra.mxu0 %v2096
        %2119 = vmatprep.subr.bf16.mxu0 0
        %2120 = vmatpush1.bf16.msra.mxu0 %v2095
        %2121 = vmatprep.subr.bf16.mxu0 0
        %2122 = vmatpush1.bf16.msra.mxu0 %v2094
        %2123 = vmatprep.subr.bf16.mxu0 0
        %2124 = vmatpush1.bf16.msra.mxu0 %v2093
        %2125 = vmatprep.subr.bf16.mxu0 0
        %2126 = vmatpush2.bf16.msra.mxu0 0
        %2127 = vmatprep.subr.bf16.mxu0 0
        %2128 = vmatpush2.bf16.msra.mxu0 0
        %2129 = vmatprep.subr.bf16.mxu0 0
        %2130 = vmatpush2.bf16.msra.mxu0 0
        %2131 = vmatprep.subr.bf16.mxu0 0
        %2132 = vmatpush2.bf16.msra.mxu0 0
        %2133 = vmatprep.subr.bf16.mxu0 0
        %2134 = vmatpush2.bf16.msra.mxu0 0
        %2135 = vmatprep.subr.bf16.mxu0 0
        %2136 = vmatpush2.bf16.msra.mxu0 0
        %2137 = vmatprep.subr.bf16.mxu0 0
        %2138 = vmatpush2.bf16.msra.mxu0 0
        %2139 = vmatprep.subr.bf16.mxu0 0
        %2140 = vmatpush2.bf16.msra.mxu0 0
        %2141 = vmatprep.mubr.bf16.mxu0 0
        %2142 = vmatmul.mubr.bf16.gmra.mxu0 %v2044
        %v2143 = vpop.f32.mrf.mxu0
        %v2144 = vadd.f32 0.0, %v2143
        %v2145 = vpop.f32.mrf.mxu0
        %v2146 = vpop.f32.mrf.mxu0
        %v2147 = vadd.f32 0.0, %v2146
        %v2148 = vpop.f32.mrf.mxu0
        %2149 = vdwg.mxu0
        %v2150 = vadd.f32 %v1874, %v2144
        %v2151 = vadd.f32 %v1875, %v2147
        %v2152 = vld [vmem:[%s720] sm:$0x1]
        %v2154 = vlaneseq
        %v2155 = vshrl.u32 %v2154, 7
        %v2156 = vsub.s32 0, %v2155
        %v2157 = vrot.slane %v2152, %v2156
        %v2159 = vadd.f32 %v2150, %v2157
        %v2160 = vadd.f32 %v2151, %v2157
        %2161 = vst [vmem:[#allocation2] sm:$0xff] %v2159
        %2162 = vst [vmem:[#allocation2 + $0x8] sm:$0xff] %v2160
        %p2163 = scmp.eq.s32.totalorder %s38, 1
        // Predicated region
        $region97: #{transformer_forward.1} parent=75 // pred_check
          %p2164 = pneg %p2163
        $region98: #{transformer_forward.1} parent=75 // pred_check_branch
          %2166 = sbr.rel (%p2164) target = $region100
        $region99: #{transformer_forward.1} parent=75 // pred_region
          %v2167 = vld [vmem:[%s12] sm:$0x1]
          %v2168 = vld [vmem:[#allocation10] sm:$0x1]
          %2169 = vadd.xlane.f32.xlu0 %v2159
          %v2170 = vpop.xlane.xlu0 %2169
          %2171 = vadd.xlane.f32.xlu0 %v2160
          %v2172 = vpop.xlane.xlu0 %2171
          %v2173 = vmul.f32 %v2170, 0.03125
          %v2174 = vmul.f32 %v2172, 0.03125
          %v2175 = vmul.f32 %v2159, %v2159
          %v2176 = vmul.f32 %v2160, %v2160
          %2177 = vadd.xlane.f32.xlu0 %v2175
          %v2178 = vpop.xlane.xlu0 %2177
          %2179 = vadd.xlane.f32.xlu0 %v2176
          %v2180 = vpop.xlane.xlu0 %2179
          %v2181 = vmul.f32 %v2178, 0.03125
          %v2182 = vmul.f32 %v2180, 0.03125
          %v2183 = vmul.f32 %v2173, %v2173
          %v2184 = vmul.f32 %v2174, %v2174
          %v2185 = vsub.f32 %v2181, %v2183
          %v2186 = vsub.f32 %v2182, %v2184
          %v2187 = vsub.f32 %v2159, %v2173
          %v2188 = vsub.f32 %v2160, %v2174
          %v2189 = vadd.f32 %v2185, 1e-05
          %v2190 = vadd.f32 %v2186, 1e-05
          %v2191 = vrsqrt.pop %v2189
          %v2192 = vrsqrt.pop %v2190
          %v2193 = vmul.f32 %v2187, %v2191
          %v2194 = vmul.f32 %v2188, %v2192
          %v2196 = vlaneseq
          %v2197 = vshrl.u32 %v2196, 7
          %v2198 = vsub.s32 0, %v2197
          %v2199 = vrot.slane %v2167, %v2198
          %v2201 = vmul.f32 %v2193, %v2199
          %v2202 = vmul.f32 %v2194, %v2199
          %v2204 = vlaneseq
          %v2205 = vshrl.u32 %v2204, 7
          %v2206 = vsub.s32 0, %v2205
          %v2207 = vrot.slane %v2168, %v2206
          %v2209 = vadd.f32 %v2201, %v2207
          %v2210 = vadd.f32 %v2202, %v2207
          %2211 = vst [vmem:[#allocation12] sm:$0xff] %v2209
          %s2212 = scalar_lea.vmem [#allocation12], 8
          %2213 = vst [vmem:[%s2212] sm:$0xff] %v2210
        $region100: #{transformer_forward.1} parent=75 // pred_fallthru
          _
        // Predicated region
        $region101: #{transformer_forward.1} parent=75 // pred_check
          %p2214 = pneg %p417
        $region102: #{transformer_forward.1} parent=75 // pred_check_branch
          %2216 = sbr.rel (%p2214) target = $region104
        $region103: #{transformer_forward.1} parent=75 // pred_region
          %s2217 = smul.u32 2, %s37
          %s2219 = ssub.s32 256, 256
          %2220 = vsyncadd [#allocation6], %s2219
          %s2221 = smul.addr %s2217, 128
          %s2222 = scalar_lea.hbm %s14, %s2221
          %s2223 = sshll.u32 [#allocation12], 4
          %s2224 = int_to_ptr.vmem [resolvable:$true] %s2223
          %2229 = dma.vmem_to_hbm [thread:$0]  %s2224, 256, %s2222, [#allocation6], 128, 128, 8
        $region104: #{transformer_forward.1} parent=75 // pred_fallthru
          _
        // Predicated region
        $region105: #{transformer_forward.1} parent=75 // pred_check
          %p2230 = pneg %p417
        $region106: #{transformer_forward.1} parent=75 // pred_check_branch
          %2232 = sbr.rel (%p2230) target = $region108
        $region107: #{transformer_forward.1} parent=75 // pred_region
          %2233 = dma.done [#allocation6], 256
        $region108: #{transformer_forward.1} parent=75 // pred_fallthru
          _
      $region76: #{transformer_forward.1} parent=5 // pred_fallthru
        _
      %p2234 = scmp.le.s32.totalorder 2, %s28
      // Predicated region
      $region109: #{transformer_forward.1} parent=5 // pred_check
        %p2235 = pneg %p2234
      $region110: #{transformer_forward.1} parent=5 // pred_check_branch
        %2237 = sbr.rel (%p2235) target = $region112
      $region111: #{transformer_forward.1} parent=5 // pred_region
        %s2238 = ssub.s32 %s28, 2
      $region112: #{transformer_forward.1} parent=5 // pred_fallthru
        _
    $region6: #{transformer_forward.1} parent=1 // loop_footer
      %s32 = sadd.s32 1, %s28
    $region7: #{transformer_forward.1} parent=1 // loop_footer_branch
      %27 = sbr.rel target = $region3
    $region8: #{transformer_forward.1} parent=1 // loop_exit
      _
    %2239 = vsyncpa [#allocation5], 1
    %s2240 = scalar_lea.sflag [#allocation5], 1
    %2241 = vsyncpa %s2240, 1
    %2242 = vsyncpa [#allocation8], 1
    %s2243 = scalar_lea.sflag [#allocation8], 1
    %2244 = vsyncpa %s2243, 1
    %2245 = vsyncpa [#allocation11], 1
    %2246 = vsyncpa [#allocation6], 1
    %s2247 = scalar_lea.sflag [#allocation6], 1
    %2248 = vsyncpa %s2247, 1

</llo_original>
